<compile_context>
chip_gen: v7x
topology: tpu7x:2x2x1
jax: 0.10.0
libtpu: 0.0.40
codegen_flags: <defaults>
</compile_context>

<pallas_src>
import functools

import jax
import jax.numpy as jnp
from jax.experimental import pallas as pl
from jax.experimental.pallas import tpu as pltpu

_EPS = 1e-12          # F.normalize default eps (denominator clamp)
_NEG = -1e30          # argmax mask for padded / out-of-range codebook columns


def _round_up(v, m):
    return (v + m - 1) // m * m


# ---------------------------------------------------------------------------
# Kernel
# ---------------------------------------------------------------------------
def _codebook_kernel(x_ref, en_ref, dist_ref, ind_ref, max_sc, arg_sc,
                     *, c_valid, tile_c):
    """One (codebook h, token-tile, codebook-block) grid step.

    x_ref   : (1, tile_n, d)       raw tokens (f32 or bf16), native dtype DMA
    en_ref  : (1, d, tile_c)       l2-normalized codebook, pre-transposed bf16
    dist_ref: (1, tile_n, tile_c)  cosine sims (dist_ref.dtype, default bf16)
    ind_ref : (1, tile_n)          argmax code ids (int32), final c-block only
    max_sc  : (1, tile_n) f32      running max across codebook blocks
    arg_sc  : (1, tile_n) i32      running argmax across codebook blocks
    """
    ci = pl.program_id(2)

    # l2-normalize the token tile: rsqrt-and-multiply, clamp sum-sq by eps**2
    # (identical to x / max(||x||, eps)).
    x = x_ref[0].astype(jnp.float32)                       # (tile_n, d)
    inv = jax.lax.rsqrt(
        jnp.maximum(jnp.sum(x * x, axis=-1, keepdims=True), _EPS * _EPS))
    xn = (x * inv).astype(jnp.bfloat16)

    # cosine similarity: bf16 x bf16 -> f32 accumulation on the MXU; the
    # codebook block arrives already transposed so this is a plain matmul.
    dist = jnp.dot(xn, en_ref[0], preferred_element_type=jnp.float32)
    dist_ref[0] = dist.astype(dist_ref.dtype)

    # running argmax across codebook blocks (handles partial last c-block).
    col = jax.lax.broadcasted_iota(jnp.int32, dist.shape, 1) + ci * tile_c
    masked = jnp.where(col < c_valid, dist, _NEG)
    loc_max = jnp.max(masked, axis=-1)[None, :]                       # (1, tn)
    loc_arg = (jnp.argmax(masked, axis=-1).astype(jnp.int32)
               + ci * tile_c)[None, :]                                # (1, tn)

    @pl.when(ci == 0)
    def _():
        max_sc[...] = loc_max
        arg_sc[...] = loc_arg

    @pl.when(ci != 0)
    def _():
        better = loc_max > max_sc[...]        # strict '>' keeps first max (torch tie-break)
        max_sc[...] = jnp.where(better, loc_max, max_sc[...])
        arg_sc[...] = jnp.where(better, loc_arg, arg_sc[...])

    @pl.when(ci == pl.num_programs(2) - 1)
    def _():
        ind_ref[...] = arg_sc[...]


# ---------------------------------------------------------------------------
# Wrapper helpers
# ---------------------------------------------------------------------------
def _vmem_capacity():
    try:
        return int(pltpu.get_tpu_info().vmem_capacity_bytes)
    except Exception:
        return 64 * 1024 * 1024            # conservative fallback (v7x-sized)


def _num_tensorcores():
    try:
        info = pltpu.get_tpu_info()
    except Exception:
        return 1
    for name in ("num_tensorcores", "num_cores", "tensorcores_per_chip",
                 "cores_per_chip"):
        v = getattr(info, name, None)
        if isinstance(v, int) and v > 0:
            return v
    return 1


def _vmem_bytes(tile_n, tile_c, d, x_bytes, dist_bytes, cb_bufs):
    """Pipeline working-set estimate (lane/sublane padded, per-buffer counts)."""
    d_lane = _round_up(d, 128)
    c_lane = _round_up(tile_c, 128)
    xb = 2 * tile_n * d_lane * x_bytes                 # x tile, double buffered
    enb = cb_bufs * _round_up(d, 16) * c_lane * 2      # codebook block(s), bf16
    distb = 2 * tile_n * c_lane * dist_bytes           # dist tile
    indb = 2 * 8 * tile_n * 4                          # ind tile
    scr = 2 * 8 * tile_n * 4                           # running max/arg scratch
    return xb + enb + distb + indb + scr


# ---------------------------------------------------------------------------
# Wrapper
# ---------------------------------------------------------------------------
def cosine_sim_codebook_forward(x, embed, *, tile_n=None, tile_c=None,
                                dist_dtype=jnp.bfloat16):
    """CosineSimCodebook.forward (eval mode, sample_codebook_temp == 0,
    codebook already initted).  Returns (quantize, embed_ind, dist, embed).

    dist is returned in `dist_dtype` (bf16 by default: the similarity matmul
    already runs with bf16 operands, and bf16 halves the dominant HBM
    writeback).  Pass dist_dtype=jnp.float32 for an f32 dist.
    """
    needs_codebook_dim = x.ndim < 4
    if needs_codebook_dim:
        x = x[None, ...]                                 # 'b n d -> 1 b n d'
    if x.dtype not in (jnp.float32, jnp.bfloat16):
        x = x.astype(jnp.float32)
    shape = x.shape
    h, c, d = embed.shape

    embed_f32 = embed.astype(jnp.float32)
    # Codebook l2-normalization + transpose hoisted out of the grid: done once
    # here and stored bf16 as (h, d, c) so the kernel never relayouts it.
    en = embed_f32 / jnp.maximum(
        jnp.sqrt(jnp.sum(embed_f32 * embed_f32, axis=-1, keepdims=True)), _EPS)
    en_t = jnp.transpose(en, (0, 2, 1)).astype(jnp.bfloat16)       # (h, d, c)

    flatten = x.reshape(h, -1, d)                        # 'h ... d -> h (...) d'
    n_tok = flatten.shape[1]
    x_bytes = flatten.dtype.itemsize
    dist_bytes = jnp.dtype(dist_dtype).itemsize

    vmem_cap = _vmem_capacity()
    budget = int(vmem_cap * 0.6)

    # Codebook-block width: full c when c <= 128 (full-dim lane exception),
    # otherwise a multiple of 128 so dist stores stay lane-dense.
    if tile_c is None:
        tile_c = c if c <= 128 else max(128, (c // 128) * 128)
    # Token tile: 1024 on 128-MiB-VMEM parts (v5e/v6e), 512 on v7x (64 MiB).
    if tile_n is None:
        tile_n = 1024 if vmem_cap >= (96 << 20) else 512
    tile_n = max(128, min(_round_up(tile_n, 128), _round_up(n_tok, 128)))

    # Split a lone token tile only when a second TensorCore exists (v7x).
    if (_num_tensorcores() >= 2 and h == 1 and n_tok > 128
            and pl.cdiv(n_tok, tile_n) < 2):
        tile_n = max(128, _round_up(pl.cdiv(n_tok, 2), 128))

    # Shrink tiles (token tile first, then codebook blocks) until the pipeline
    # working set fits the VMEM budget.
    def _fits(tn, tc):
        bufs = 1 if pl.cdiv(c, tc) == 1 else 2
        return _vmem_bytes(tn, tc, d, x_bytes, dist_bytes, bufs) <= budget

    while not _fits(tile_n, tile_c):
        if tile_n > 256:
            tile_n = max(256, (tile_n // 2) // 128 * 128)
        elif tile_c > 128:
            tile_c = max(128, (tile_c // 2) // 128 * 128)
        elif tile_n > 128:
            tile_n = 128
        else:
            break

    n_cblk = pl.cdiv(c, tile_c)
    single_buffer_codebook = n_cblk == 1     # resident block: 2nd buffer wasted
    grid = (h, pl.cdiv(n_tok, tile_n), n_cblk)

    est = _vmem_bytes(tile_n, tile_c, d, x_bytes, dist_bytes,
                      1 if single_buffer_codebook else 2)
    vmem_limit = min(int(vmem_cap * 0.9),
                     max(48 << 20, int(est * 2) + (8 << 20)))

    kernel = functools.partial(_codebook_kernel, c_valid=c, tile_c=tile_c)
    out_shapes = (
        jax.ShapeDtypeStruct((h, n_tok, c), dist_dtype),   # dist, no post-slice
        jax.ShapeDtypeStruct((h, n_tok), jnp.int32),       # embed_ind (flat)
    )

    def _build_call(use_single_buffer):
        en_kwargs = {}
        if use_single_buffer and hasattr(pl, "Buffered"):
            en_kwargs["pipeline_mode"] = pl.Buffered(1)
        in_specs = [
            # x tile: full d (no pad of x along d -> no extra HBM traffic);
            # partial last token block handled by Pallas boundary masking.
            pl.BlockSpec((1, tile_n, d), lambda hi, ti, ci: (hi, ti, 0)),
            # pre-transposed normalized codebook block.
            pl.BlockSpec((1, d, tile_c), lambda hi, ti, ci: (hi, 0, ci),
                         **en_kwargs),
        ]
        out_specs = (
            pl.BlockSpec((1, tile_n, tile_c), lambda hi, ti, ci: (hi, ti, ci)),
            pl.BlockSpec((1, tile_n), lambda hi, ti, ci: (hi, ti)),
        )
        return pl.pallas_call(
            kernel,
            out_shape=out_shapes,
            grid_spec=pltpu.PrefetchScalarGridSpec(
                num_scalar_prefetch=0,
                grid=grid,
                in_specs=in_specs,
                out_specs=out_specs,
                scratch_shapes=[pltpu.VMEM((1, tile_n), jnp.float32),
                                pltpu.VMEM((1, tile_n), jnp.int32)],
            ),
            compiler_params=pltpu.CompilerParams(
                dimension_semantics=("parallel", "parallel", "arbitrary"),
                vmem_limit_bytes=vmem_limit),
        )

    try:
        dist, ind = _build_call(single_buffer_codebook)(flatten, en_t)
    except Exception:
        if not single_buffer_codebook:
            raise
        # Portability fallback if pipeline_mode=pl.Buffered(1) is rejected.
        dist, ind = _build_call(False)(flatten, en_t)

    # quantize gathers rows of the RAW codebook buffer, matching
    # `batched_embedding(embed_ind, self.embed)` in the PyTorch module.
    # O(n*d) exact XLA gather (cheaper than an in-kernel f32 one-hot matmul).
    quant = jnp.take_along_axis(embed_f32, ind[..., None], axis=1)

    embed_ind = ind.reshape(shape[:-1])                  # (h, b, n)
    quantize = quant.reshape(shape)                      # (h, b, n, d)
    if needs_codebook_dim:
        quantize = quantize[0]
        embed_ind = embed_ind[0]
    return quantize, embed_ind, dist, embed_f32


# ---------------------------------------------------------------------------
# Init + reference (pure JAX), for the self-test
# ---------------------------------------------------------------------------
def _init_embed(key, num_codebooks, codebook_size, dim):
    # kaiming_uniform_-style init (bound = sqrt(6 / fan_in)), then l2norm,
    # exactly as CosineSimCodebook.__init__ with kmeans_init=False.
    fan_in = codebook_size * dim
    bound = (6.0 / fan_in) ** 0.5
    t = jax.random.uniform(key, (num_codebooks, codebook_size, dim),
                           jnp.float32, -bound, bound)
    n = jnp.sqrt(jnp.sum(t * t, axis=-1, keepdims=True))
    return t / jnp.maximum(n, _EPS)


def _reference_dist(x, embed):
    xh = x[None, ...] if x.ndim < 4 else x
    h, c, d = embed.shape
    flat = xh.reshape(h, -1, d)
    fn = flat / jnp.maximum(jnp.linalg.norm(flat, axis=-1, keepdims=True), _EPS)
    en = embed / jnp.maximum(jnp.linalg.norm(embed, axis=-1, keepdims=True), _EPS)
    return jnp.einsum('hnd,hcd->hnc', fn, en)


if __name__ == "__main__":
    def run_case(key, dim, codebook_size, num_codebooks, batch, seq, **fwd_kwargs):
        k_embed, k_x = jax.random.split(key)
        embed = _init_embed(k_embed, num_codebooks, codebook_size, dim)
        x = jax.random.normal(k_x, (batch, seq, dim), jnp.float32)

        quantize, embed_ind, dist, embed_out = cosine_sim_codebook_forward(
            x, embed, **fwd_kwargs)
        jax.block_until_ready((quantize, embed_ind, dist, embed_out))

        # Correctness vs a pure-JAX f32 reference.  The kernel's similarity
        # matmul runs with bf16 operands (and dist is bf16 by default), so the
        # dist tolerance is loose and code selection is checked as near-argmax.
        d_ref = _reference_dist(x, embed)
        n_flat = batch * seq
        assert quantize.shape == (batch, seq, dim)
        assert embed_ind.shape == (batch, seq)
        assert dist.shape == (num_codebooks, n_flat, codebook_size)
        assert jnp.allclose(dist.astype(jnp.float32), d_ref, atol=2e-2)

        flat_ind = embed_ind.reshape(num_codebooks, -1)
        chosen = jnp.take_along_axis(d_ref, flat_ind[..., None], axis=-1)[..., 0]
        assert jnp.all(chosen >= d_ref.max(axis=-1) - 3e-2)
        gathered = jnp.take_along_axis(embed, flat_ind[..., None], axis=1)
        assert jnp.array_equal(quantize, gathered.reshape(quantize.shape))

    key = jax.random.PRNGKey(0)
    k0, k1, k2 = jax.random.split(key, 3)

    # 1) lane-aligned case: single resident codebook block (Buffered(1) path).
    run_case(k0, dim=32, codebook_size=128, num_codebooks=1, batch=2, seq=64)
    # 2) ragged case: d, c and token count all off the (8,128) grid; full-dim
    #    blocks + partial boundary token block; f32 dist writeback exercised.
    run_case(k1, dim=48, codebook_size=100, num_codebooks=1, batch=2, seq=40,
             dist_dtype=jnp.float32)
    # 3) multi-c-block case: exercises the running max/argmax merge axis.
    run_case(k2, dim=32, codebook_size=256, num_codebooks=1, batch=2, seq=64,
             tile_c=128)

    print("KERNEL_OK")
</pallas_src>

<mosaic_0001>
module attributes {stable_mosaic.version = 11 : i64} {
  func.func @_codebook_kernel(%arg0: i32, %arg1: i32, %arg2: i32, %arg3: memref<1x128x32xf32, #tpu.memory_space<vmem>>, %arg4: memref<1x32x128xbf16, #tpu.memory_space<vmem>>, %arg5: memref<1x128x128xbf16, #tpu.memory_space<vmem>>, %arg6: memref<1x128xi32, #tpu.memory_space<vmem>>, %arg7: memref<1x128xf32, #tpu.memory_space<vmem>>, %arg8: memref<1x128xi32, #tpu.memory_space<vmem>>) attributes {dimension_semantics = [#tpu.dimension_semantics<parallel>, #tpu.dimension_semantics<parallel>, #tpu.dimension_semantics<arbitrary>], iteration_bounds = array<i64: 1, 1, 1>, scalar_prefetch = 0 : i64, scratch_operands = 2 : i64, tpu.core_type = #tpu.core_type<tc>, window_params = [{transform_indices = @transform_0, window_bounds = array<i64: 1, 128, 32>}, {pipeline_mode = #tpu.pipeline_mode<synchronous>, transform_indices = @transform_1, window_bounds = array<i64: 1, 32, 128>}, {transform_indices = @transform_2, window_bounds = array<i64: 1, 128, 128>}, {transform_indices = @transform_3, window_bounds = array<i64: 1, 128>}]} {
    %c0 = arith.constant 0 : index
    %c0_0 = arith.constant 0 : index
    %c0_1 = arith.constant 0 : index
    %0 = vector.load %arg3[%c0, %c0_0, %c0_1] : memref<1x128x32xf32, #tpu.memory_space<vmem>>, vector<1x128x32xf32>
    %1 = vector.shape_cast %0 : vector<1x128x32xf32> to vector<128x32xf32>
    %2 = arith.mulf %1, %1 : vector<128x32xf32>
    %cst = arith.constant dense<0.000000e+00> : vector<128xf32>
    %3 = vector.multi_reduction <add>, %2, %cst [1] : vector<128x32xf32> to vector<128xf32>
    %4 = vector.shape_cast %3 : vector<128xf32> to vector<128x1xf32>
    %cst_2 = arith.constant 1.000000e-24 : f32
    %5 = vector.broadcast %cst_2 : f32 to vector<128x1xf32>
    %6 = arith.maximumf %4, %5 : vector<128x1xf32>
    %7 = math.rsqrt %6 : vector<128x1xf32>
    %8 = vector.broadcast %7 : vector<128x1xf32> to vector<128x32xf32>
    %9 = arith.mulf %1, %8 : vector<128x32xf32>
    %10 = arith.truncf %9 : vector<128x32xf32> to vector<128x32xbf16>
    %c0_3 = arith.constant 0 : index
    %c0_4 = arith.constant 0 : index
    %c0_5 = arith.constant 0 : index
    %11 = vector.load %arg4[%c0_3, %c0_4, %c0_5] : memref<1x32x128xbf16, #tpu.memory_space<vmem>>, vector<1x32x128xbf16>
    %12 = vector.shape_cast %11 : vector<1x32x128xbf16> to vector<32x128xbf16>
    %cst_6 = arith.constant dense<0.000000e+00> : vector<128x128xf32>
    %13 = tpu.matmul %10, %12, %cst_6 {dimension_numbers = #tpu.dot_dimension_numbers<[1], [0], [0], [1], [0, 0, 1, 1], [], []>} : vector<128x32xbf16>, vector<32x128xbf16>, vector<128x128xf32> -> vector<128x128xf32>
    %14 = arith.truncf %13 : vector<128x128xf32> to vector<128x128xbf16>
    %c0_7 = arith.constant 0 : index
    %c0_8 = arith.constant 0 : index
    %c0_9 = arith.constant 0 : index
    %15 = vector.load %arg5[%c0_7, %c0_8, %c0_9] : memref<1x128x128xbf16, #tpu.memory_space<vmem>>, vector<1x128x128xbf16>
    %16 = vector.shape_cast %15 : vector<1x128x128xbf16> to vector<128x128xbf16>
    %17 = vector.shape_cast %14 : vector<128x128xbf16> to vector<1x128x128xbf16>
    tpu.vector_store %arg5[%c0_7, %c0_8, %c0_9], %17 {strides = array<i32>} : memref<1x128x128xbf16, #tpu.memory_space<vmem>>, vector<1x128x128xbf16>,
    %18 = tpu.iota {dimensions = array<i32: 1>} : vector<128x128xi32>
    %c128_i32 = arith.constant 128 : i32
    %19 = arith.muli %arg2, %c128_i32 : i32
    %20 = vector.broadcast %19 : i32 to vector<128x128xi32>
    %21 = arith.addi %18, %20 : vector<128x128xi32>
    %c128_i32_10 = arith.constant 128 : i32
    %22 = vector.broadcast %c128_i32_10 : i32 to vector<128x128xi32>
    %23 = arith.cmpi slt, %21, %22 : vector<128x128xi32>
    %cst_11 = arith.constant -1.000000e+30 : f32
    %24 = vector.broadcast %cst_11 : f32 to vector<128x128xf32>
    %25 = arith.select %23, %13, %24 : vector<128x128xi1>, vector<128x128xf32>
    %cst_12 = arith.constant dense<0xFF800000> : vector<128xf32>
    %26 = vector.multi_reduction <maximumf>, %25, %cst_12 [1] : vector<128x128xf32> to vector<128xf32>
    %27 = vector.shape_cast %26 : vector<128xf32> to vector<1x128xf32>
    %28 = tpu.reduce_index %25 {axis = 1 : i32, kind = #tpu.reduction_kind<arg_max>} : vector<128x128xf32> -> vector<128xi32>
    %c128_i32_13 = arith.constant 128 : i32
    %29 = arith.muli %arg2, %c128_i32_13 : i32
    %30 = vector.broadcast %29 : i32 to vector<128xi32>
    %31 = arith.addi %28, %30 : vector<128xi32>
    %32 = vector.shape_cast %31 : vector<128xi32> to vector<1x128xi32>
    %c0_i32 = arith.constant 0 : i32
    %33 = arith.cmpi eq, %arg2, %c0_i32 : i32
    %34 = arith.extui %33 : i1 to i32
    %c0_i32_14 = arith.constant 0 : i32
    %35 = arith.cmpi ne, %34, %c0_i32_14 : i32
    scf.if %35 {
      %c0_19 = arith.constant 0 : index
      %c0_20 = arith.constant 0 : index
      %42 = vector.load %arg7[%c0_19, %c0_20] : memref<1x128xf32, #tpu.memory_space<vmem>>, vector<1x128xf32>
      tpu.vector_store %arg7[%c0_19, %c0_20], %27 {strides = array<i32>} : memref<1x128xf32, #tpu.memory_space<vmem>>, vector<1x128xf32>,
      %c0_21 = arith.constant 0 : index
      %c0_22 = arith.constant 0 : index
      %43 = vector.load %arg8[%c0_21, %c0_22] : memref<1x128xi32, #tpu.memory_space<vmem>>, vector<1x128xi32>
      tpu.vector_store %arg8[%c0_21, %c0_22], %32 {strides = array<i32>} : memref<1x128xi32, #tpu.memory_space<vmem>>, vector<1x128xi32>,
    } else {
    }
    %c0_i32_15 = arith.constant 0 : i32
    %36 = arith.cmpi ne, %arg2, %c0_i32_15 : i32
    %37 = arith.extui %36 : i1 to i32
    %c0_i32_16 = arith.constant 0 : i32
    %38 = arith.cmpi ne, %37, %c0_i32_16 : i32
    scf.if %38 {
      %c0_19 = arith.constant 0 : index
      %c0_20 = arith.constant 0 : index
      %42 = vector.load %arg7[%c0_19, %c0_20] : memref<1x128xf32, #tpu.memory_space<vmem>>, vector<1x128xf32>
      %43 = arith.cmpf ogt, %27, %42 : vector<1x128xf32>
      %c0_21 = arith.constant 0 : index
      %c0_22 = arith.constant 0 : index
      %44 = vector.load %arg7[%c0_21, %c0_22] : memref<1x128xf32, #tpu.memory_space<vmem>>, vector<1x128xf32>
      %45 = arith.select %43, %27, %44 : vector<1x128xi1>, vector<1x128xf32>
      %c0_23 = arith.constant 0 : index
      %c0_24 = arith.constant 0 : index
      %46 = vector.load %arg7[%c0_23, %c0_24] : memref<1x128xf32, #tpu.memory_space<vmem>>, vector<1x128xf32>
      tpu.vector_store %arg7[%c0_23, %c0_24], %45 {strides = array<i32>} : memref<1x128xf32, #tpu.memory_space<vmem>>, vector<1x128xf32>,
      %c0_25 = arith.constant 0 : index
      %c0_26 = arith.constant 0 : index
      %47 = vector.load %arg8[%c0_25, %c0_26] : memref<1x128xi32, #tpu.memory_space<vmem>>, vector<1x128xi32>
      %48 = arith.select %43, %32, %47 : vector<1x128xi1>, vector<1x128xi32>
      %c0_27 = arith.constant 0 : index
      %c0_28 = arith.constant 0 : index
      %49 = vector.load %arg8[%c0_27, %c0_28] : memref<1x128xi32, #tpu.memory_space<vmem>>, vector<1x128xi32>
      tpu.vector_store %arg8[%c0_27, %c0_28], %48 {strides = array<i32>} : memref<1x128xi32, #tpu.memory_space<vmem>>, vector<1x128xi32>,
    } else {
    }
    %c0_i32_17 = arith.constant 0 : i32
    %39 = arith.cmpi eq, %arg2, %c0_i32_17 : i32
    %40 = arith.extui %39 : i1 to i32
    %c0_i32_18 = arith.constant 0 : i32
    %41 = arith.cmpi ne, %40, %c0_i32_18 : i32
    scf.if %41 {
      %c0_19 = arith.constant 0 : index
      %c0_20 = arith.constant 0 : index
      %42 = vector.load %arg8[%c0_19, %c0_20] : memref<1x128xi32, #tpu.memory_space<vmem>>, vector<1x128xi32>
      %c0_21 = arith.constant 0 : index
      %c0_22 = arith.constant 0 : index
      %43 = vector.load %arg6[%c0_21, %c0_22] : memref<1x128xi32, #tpu.memory_space<vmem>>, vector<1x128xi32>
      tpu.vector_store %arg6[%c0_21, %c0_22], %42 {strides = array<i32>} : memref<1x128xi32, #tpu.memory_space<vmem>>, vector<1x128xi32>,
    } else {
    }
    return
  }
  func.func @transform_0(%arg0: i32, %arg1: i32, %arg2: i32) -> (i32, i32, i32) {
    %c0_i32 = arith.constant 0 : i32
    %c0_i32_0 = arith.constant 0 : i32
    return %arg0, %arg1, %c0_i32 : i32, i32, i32
  }
  func.func @transform_1(%arg0: i32, %arg1: i32, %arg2: i32) -> (i32, i32, i32) {
    %c0_i32 = arith.constant 0 : i32
    %c0_i32_0 = arith.constant 0 : i32
    return %arg0, %c0_i32, %arg2 : i32, i32, i32
  }
  func.func @transform_2(%arg0: i32, %arg1: i32, %arg2: i32) -> (i32, i32, i32) {
    %c0_i32 = arith.constant 0 : i32
    return %arg0, %arg1, %arg2 : i32, i32, i32
  }
  func.func @transform_3(%arg0: i32, %arg1: i32, %arg2: i32) -> (i32, i32) {
    %c0_i32 = arith.constant 0 : i32
    return %arg0, %arg1 : i32, i32
  }
}

module attributes {stable_mosaic.version = 11 : i64} {
  func.func @_codebook_kernel(%arg0: i32, %arg1: i32, %arg2: i32, %arg3: memref<1x128x32xf32, #tpu.memory_space<vmem>>, %arg4: memref<1x32x128xbf16, #tpu.memory_space<vmem>>, %arg5: memref<1x128x128xbf16, #tpu.memory_space<vmem>>, %arg6: memref<1x128xi32, #tpu.memory_space<vmem>>, %arg7: memref<1x128xf32, #tpu.memory_space<vmem>>, %arg8: memref<1x128xi32, #tpu.memory_space<vmem>>) attributes {dimension_semantics = [#tpu.dimension_semantics<parallel>, #tpu.dimension_semantics<parallel>, #tpu.dimension_semantics<arbitrary>], iteration_bounds = array<i64: 1, 1, 1>, scalar_prefetch = 0 : i64, scratch_operands = 2 : i64, tpu.core_type = #tpu.core_type<tc>, window_params = [{transform_indices = @transform_0, window_bounds = array<i64: 1, 128, 32>}, {transform_indices = @transform_1, window_bounds = array<i64: 1, 32, 128>}, {transform_indices = @transform_2, window_bounds = array<i64: 1, 128, 128>}, {transform_indices = @transform_3, window_bounds = array<i64: 1, 128>}]} {
    %c0 = arith.constant 0 : index
    %c0_0 = arith.constant 0 : index
    %c0_1 = arith.constant 0 : index
    %0 = vector.load %arg3[%c0, %c0_0, %c0_1] : memref<1x128x32xf32, #tpu.memory_space<vmem>>, vector<1x128x32xf32>
    %1 = vector.shape_cast %0 : vector<1x128x32xf32> to vector<128x32xf32>
    %2 = arith.mulf %1, %1 : vector<128x32xf32>
    %cst = arith.constant dense<0.000000e+00> : vector<128xf32>
    %3 = vector.multi_reduction <add>, %2, %cst [1] : vector<128x32xf32> to vector<128xf32>
    %4 = vector.shape_cast %3 : vector<128xf32> to vector<128x1xf32>
    %cst_2 = arith.constant 1.000000e-24 : f32
    %5 = vector.broadcast %cst_2 : f32 to vector<128x1xf32>
    %6 = arith.maximumf %4, %5 : vector<128x1xf32>
    %7 = math.rsqrt %6 : vector<128x1xf32>
    %8 = vector.broadcast %7 : vector<128x1xf32> to vector<128x32xf32>
    %9 = arith.mulf %1, %8 : vector<128x32xf32>
    %10 = arith.truncf %9 : vector<128x32xf32> to vector<128x32xbf16>
    %c0_3 = arith.constant 0 : index
    %c0_4 = arith.constant 0 : index
    %c0_5 = arith.constant 0 : index
    %11 = vector.load %arg4[%c0_3, %c0_4, %c0_5] : memref<1x32x128xbf16, #tpu.memory_space<vmem>>, vector<1x32x128xbf16>
    %12 = vector.shape_cast %11 : vector<1x32x128xbf16> to vector<32x128xbf16>
    %cst_6 = arith.constant dense<0.000000e+00> : vector<128x128xf32>
    %13 = tpu.matmul %10, %12, %cst_6 {dimension_numbers = #tpu.dot_dimension_numbers<[1], [0], [0], [1], [0, 0, 1, 1], [], []>} : vector<128x32xbf16>, vector<32x128xbf16>, vector<128x128xf32> -> vector<128x128xf32>
    %14 = arith.truncf %13 : vector<128x128xf32> to vector<128x128xbf16>
    %c0_7 = arith.constant 0 : index
    %c0_8 = arith.constant 0 : index
    %c0_9 = arith.constant 0 : index
    %15 = vector.load %arg5[%c0_7, %c0_8, %c0_9] : memref<1x128x128xbf16, #tpu.memory_space<vmem>>, vector<1x128x128xbf16>
    %16 = vector.shape_cast %15 : vector<1x128x128xbf16> to vector<128x128xbf16>
    %17 = vector.shape_cast %14 : vector<128x128xbf16> to vector<1x128x128xbf16>
    tpu.vector_store %arg5[%c0_7, %c0_8, %c0_9], %17 {strides = array<i32>} : memref<1x128x128xbf16, #tpu.memory_space<vmem>>, vector<1x128x128xbf16>,
    %18 = tpu.iota {dimensions = array<i32: 1>} : vector<128x128xi32>
    %c128_i32 = arith.constant 128 : i32
    %19 = arith.muli %arg2, %c128_i32 : i32
    %20 = vector.broadcast %19 : i32 to vector<128x128xi32>
    %21 = arith.addi %18, %20 : vector<128x128xi32>
    %c128_i32_10 = arith.constant 128 : i32
    %22 = vector.broadcast %c128_i32_10 : i32 to vector<128x128xi32>
    %23 = arith.cmpi slt, %21, %22 : vector<128x128xi32>
    %cst_11 = arith.constant -1.000000e+30 : f32
    %24 = vector.broadcast %cst_11 : f32 to vector<128x128xf32>
    %25 = arith.select %23, %13, %24 : vector<128x128xi1>, vector<128x128xf32>
    %cst_12 = arith.constant dense<0xFF800000> : vector<128xf32>
    %26 = vector.multi_reduction <maximumf>, %25, %cst_12 [1] : vector<128x128xf32> to vector<128xf32>
    %27 = vector.shape_cast %26 : vector<128xf32> to vector<1x128xf32>
    %28 = tpu.reduce_index %25 {axis = 1 : i32, kind = #tpu.reduction_kind<arg_max>} : vector<128x128xf32> -> vector<128xi32>
    %c128_i32_13 = arith.constant 128 : i32
    %29 = arith.muli %arg2, %c128_i32_13 : i32
    %30 = vector.broadcast %29 : i32 to vector<128xi32>
    %31 = arith.addi %28, %30 : vector<128xi32>
    %32 = vector.shape_cast %31 : vector<128xi32> to vector<1x128xi32>
    %c0_i32 = arith.constant 0 : i32
    %33 = arith.cmpi eq, %arg2, %c0_i32 : i32
    %34 = arith.extui %33 : i1 to i32
    %c0_i32_14 = arith.constant 0 : i32
    %35 = arith.cmpi ne, %34, %c0_i32_14 : i32
    scf.if %35 {
      %c0_19 = arith.constant 0 : index
      %c0_20 = arith.constant 0 : index
      %42 = vector.load %arg7[%c0_19, %c0_20] : memref<1x128xf32, #tpu.memory_space<vmem>>, vector<1x128xf32>
      tpu.vector_store %arg7[%c0_19, %c0_20], %27 {strides = array<i32>} : memref<1x128xf32, #tpu.memory_space<vmem>>, vector<1x128xf32>,
      %c0_21 = arith.constant 0 : index
      %c0_22 = arith.constant 0 : index
      %43 = vector.load %arg8[%c0_21, %c0_22] : memref<1x128xi32, #tpu.memory_space<vmem>>, vector<1x128xi32>
      tpu.vector_store %arg8[%c0_21, %c0_22], %32 {strides = array<i32>} : memref<1x128xi32, #tpu.memory_space<vmem>>, vector<1x128xi32>,
    } else {
    }
    %c0_i32_15 = arith.constant 0 : i32
    %36 = arith.cmpi ne, %arg2, %c0_i32_15 : i32
    %37 = arith.extui %36 : i1 to i32
    %c0_i32_16 = arith.constant 0 : i32
    %38 = arith.cmpi ne, %37, %c0_i32_16 : i32
    scf.if %38 {
      %c0_19 = arith.constant 0 : index
      %c0_20 = arith.constant 0 : index
      %42 = vector.load %arg7[%c0_19, %c0_20] : memref<1x128xf32, #tpu.memory_space<vmem>>, vector<1x128xf32>
      %43 = arith.cmpf ogt, %27, %42 : vector<1x128xf32>
      %c0_21 = arith.constant 0 : index
      %c0_22 = arith.constant 0 : index
      %44 = vector.load %arg7[%c0_21, %c0_22] : memref<1x128xf32, #tpu.memory_space<vmem>>, vector<1x128xf32>
      %45 = arith.select %43, %27, %44 : vector<1x128xi1>, vector<1x128xf32>
      %c0_23 = arith.constant 0 : index
      %c0_24 = arith.constant 0 : index
      %46 = vector.load %arg7[%c0_23, %c0_24] : memref<1x128xf32, #tpu.memory_space<vmem>>, vector<1x128xf32>
      tpu.vector_store %arg7[%c0_23, %c0_24], %45 {strides = array<i32>} : memref<1x128xf32, #tpu.memory_space<vmem>>, vector<1x128xf32>,
      %c0_25 = arith.constant 0 : index
      %c0_26 = arith.constant 0 : index
      %47 = vector.load %arg8[%c0_25, %c0_26] : memref<1x128xi32, #tpu.memory_space<vmem>>, vector<1x128xi32>
      %48 = arith.select %43, %32, %47 : vector<1x128xi1>, vector<1x128xi32>
      %c0_27 = arith.constant 0 : index
      %c0_28 = arith.constant 0 : index
      %49 = vector.load %arg8[%c0_27, %c0_28] : memref<1x128xi32, #tpu.memory_space<vmem>>, vector<1x128xi32>
      tpu.vector_store %arg8[%c0_27, %c0_28], %48 {strides = array<i32>} : memref<1x128xi32, #tpu.memory_space<vmem>>, vector<1x128xi32>,
    } else {
    }
    %c0_i32_17 = arith.constant 0 : i32
    %39 = arith.cmpi eq, %arg2, %c0_i32_17 : i32
    %40 = arith.extui %39 : i1 to i32
    %c0_i32_18 = arith.constant 0 : i32
    %41 = arith.cmpi ne, %40, %c0_i32_18 : i32
    scf.if %41 {
      %c0_19 = arith.constant 0 : index
      %c0_20 = arith.constant 0 : index
      %42 = vector.load %arg8[%c0_19, %c0_20] : memref<1x128xi32, #tpu.memory_space<vmem>>, vector<1x128xi32>
      %c0_21 = arith.constant 0 : index
      %c0_22 = arith.constant 0 : index
      %43 = vector.load %arg6[%c0_21, %c0_22] : memref<1x128xi32, #tpu.memory_space<vmem>>, vector<1x128xi32>
      tpu.vector_store %arg6[%c0_21, %c0_22], %42 {strides = array<i32>} : memref<1x128xi32, #tpu.memory_space<vmem>>, vector<1x128xi32>,
    } else {
    }
    return
  }
  func.func @transform_0(%arg0: i32, %arg1: i32, %arg2: i32) -> (i32, i32, i32) {
    %c0_i32 = arith.constant 0 : i32
    %c0_i32_0 = arith.constant 0 : i32
    return %arg0, %arg1, %c0_i32 : i32, i32, i32
  }
  func.func @transform_1(%arg0: i32, %arg1: i32, %arg2: i32) -> (i32, i32, i32) {
    %c0_i32 = arith.constant 0 : i32
    %c0_i32_0 = arith.constant 0 : i32
    return %arg0, %c0_i32, %arg2 : i32, i32, i32
  }
  func.func @transform_2(%arg0: i32, %arg1: i32, %arg2: i32) -> (i32, i32, i32) {
    %c0_i32 = arith.constant 0 : i32
    return %arg0, %arg1, %arg2 : i32, i32, i32
  }
  func.func @transform_3(%arg0: i32, %arg1: i32, %arg2: i32) -> (i32, i32) {
    %c0_i32 = arith.constant 0 : i32
    return %arg0, %arg1 : i32, i32
  }
}

</mosaic_0001>

<llo_original>
// kernel: tpu_custom_call.1
$region0: #{tpu_custom_call.1}
  #allocation0 [shape = 'u32[]', space=smem, size = 0x4, offset = 0x4, fixed_abs, tag = 'smem constant byte address 0x4 - core index']
  #allocation1 [shape = 'u32[144,128]{1,0:T(1,128)}', space=vmem, size = 0x12000, scoped, tag = 'internal scratch']
  #allocation2 [shape = 'f32[1,128]{1,0:T(1,128)}', space=vmem, size = 0x200, scoped, tag = 'scratch operand']
  #allocation3 [shape = 's32[1,128]{1,0:T(1,128)}', space=vmem, size = 0x200, scoped, tag = 'scratch operand']
  %s0 = inlined_call_operand.vmem [shape: f32[1,128,32], index: 0, kind: input, shape index: {}]
  %s1 = inlined_call_operand.vmem [shape: bf16[1,32,128], index: 1, kind: input, shape index: {}]
  %s2 = inlined_call_operand.hbm [shape: bf16[1,128,128], index: 2, kind: output, shape index: {0}]
  %s3 = inlined_call_operand.hbm [shape: s32[1,128], index: 3, kind: output, shape index: {1}]
  %4 = xla_tuple %s2, %s3
  %s5 = sld [smem:[#allocation0]]
  $region38: #{tpu_custom_call.1} parent=0
    _
  %s7 = ssub.s32 1, %s5
  %s8 = scalar_select 0, %s7, %s5
  $region1: #{tpu_custom_call.1} parent=0
    #allocation4 [shape = 'u8[32768]{0}', space=vmem, size = 0x8000, scoped, tag = 'output window, operand 0, single buffered']
    #allocation5 [shape = 's32[1]{0}', space=sflag, size = 0x4, scoped, tag = 'scoped memory for tpu_custom_call.1']
    #allocation6 [shape = 'u8[512]{0}', space=vmem, size = 0x400, scoped, tag = 'output window, operand 1, single buffered']
    #allocation7 [shape = 's32[1]{0}', space=sflag, size = 0x4, scoped, tag = 'scoped memory for tpu_custom_call.1']
    %9 = vsyncpa [#allocation5], 0
    %10 = vsyncpa [#allocation7], 0
    // Predicated region
    $region2: #{tpu_custom_call.1} parent=1 // pred_check
      _
    $region3: #{tpu_custom_call.1} parent=1 // pred_check_branch
      %12 = sbr.rel (0) target = $region5
    $region4: #{tpu_custom_call.1} parent=1 // pred_region
      _
    $region5: #{tpu_custom_call.1} parent=1 // pred_fallthru
      _
    // Predicated region
    $region6: #{tpu_custom_call.1} parent=1 // pred_check
      _
    $region7: #{tpu_custom_call.1} parent=1 // pred_check_branch
      %14 = sbr.rel (0) target = $region9
    $region8: #{tpu_custom_call.1} parent=1 // pred_region
      _
    $region9: #{tpu_custom_call.1} parent=1 // pred_fallthru
      _
    %v16 = vld [vmem:[%s0] sm:$0xff]
    %v17 = vld [vmem:[%s0 + $0x8] sm:$0xff]
    %v18 = vld [vmem:[%s0 + $0x10] sm:$0xff]
    %v19 = vld [vmem:[%s0 + $0x18] sm:$0xff]
    %v20 = vld [vmem:[%s0 + $0x20] sm:$0xff]
    %v21 = vld [vmem:[%s0 + $0x28] sm:$0xff]
    %v22 = vld [vmem:[%s0 + $0x30] sm:$0xff]
    %v23 = vld [vmem:[%s0 + $0x38] sm:$0xff]
    %v24 = vld [vmem:[%s0 + $0x40] sm:$0xff]
    %v25 = vld [vmem:[%s0 + $0x48] sm:$0xff]
    %v26 = vld [vmem:[%s0 + $0x50] sm:$0xff]
    %v27 = vld [vmem:[%s0 + $0x58] sm:$0xff]
    %v28 = vld [vmem:[%s0 + $0x60] sm:$0xff]
    %v29 = vld [vmem:[%s0 + $0x68] sm:$0xff]
    %v30 = vld [vmem:[%s0 + $0x70] sm:$0xff]
    %v31 = vld [vmem:[%s0 + $0x78] sm:$0xff]
    %v32 = vmul.f32 %v16, %v16
    %v33 = vmul.f32 %v17, %v17
    %v34 = vmul.f32 %v18, %v18
    %v35 = vmul.f32 %v19, %v19
    %v36 = vmul.f32 %v20, %v20
    %v37 = vmul.f32 %v21, %v21
    %v38 = vmul.f32 %v22, %v22
    %v39 = vmul.f32 %v23, %v23
    %v40 = vmul.f32 %v24, %v24
    %v41 = vmul.f32 %v25, %v25
    %v42 = vmul.f32 %v26, %v26
    %v43 = vmul.f32 %v27, %v27
    %v44 = vmul.f32 %v28, %v28
    %v45 = vmul.f32 %v29, %v29
    %v46 = vmul.f32 %v30, %v30
    %v47 = vmul.f32 %v31, %v31
    %vm48 = vcmask 261120
    %v49 = vsel %vm48, %v32, 0.0
    %50 = vadd.xlane.f32.xlu0 %v49
    %v51 = vpop.xlane.xlu0 %50
    %v52 = vsel %vm48, %v33, 0.0
    %53 = vadd.xlane.f32.xlu0 %v52
    %v54 = vpop.xlane.xlu0 %53
    %v55 = vsel %vm48, %v34, 0.0
    %56 = vadd.xlane.f32.xlu0 %v55
    %v57 = vpop.xlane.xlu0 %56
    %v58 = vsel %vm48, %v35, 0.0
    %59 = vadd.xlane.f32.xlu0 %v58
    %v60 = vpop.xlane.xlu0 %59
    %v61 = vsel %vm48, %v36, 0.0
    %62 = vadd.xlane.f32.xlu0 %v61
    %v63 = vpop.xlane.xlu0 %62
    %v64 = vsel %vm48, %v37, 0.0
    %65 = vadd.xlane.f32.xlu0 %v64
    %v66 = vpop.xlane.xlu0 %65
    %v67 = vsel %vm48, %v38, 0.0
    %68 = vadd.xlane.f32.xlu0 %v67
    %v69 = vpop.xlane.xlu0 %68
    %v70 = vsel %vm48, %v39, 0.0
    %71 = vadd.xlane.f32.xlu0 %v70
    %v72 = vpop.xlane.xlu0 %71
    %v73 = vsel %vm48, %v40, 0.0
    %74 = vadd.xlane.f32.xlu0 %v73
    %v75 = vpop.xlane.xlu0 %74
    %v76 = vsel %vm48, %v41, 0.0
    %77 = vadd.xlane.f32.xlu0 %v76
    %v78 = vpop.xlane.xlu0 %77
    %v79 = vsel %vm48, %v42, 0.0
    %80 = vadd.xlane.f32.xlu0 %v79
    %v81 = vpop.xlane.xlu0 %80
    %v82 = vsel %vm48, %v43, 0.0
    %83 = vadd.xlane.f32.xlu0 %v82
    %v84 = vpop.xlane.xlu0 %83
    %v85 = vsel %vm48, %v44, 0.0
    %86 = vadd.xlane.f32.xlu0 %v85
    %v87 = vpop.xlane.xlu0 %86
    %v88 = vsel %vm48, %v45, 0.0
    %89 = vadd.xlane.f32.xlu0 %v88
    %v90 = vpop.xlane.xlu0 %89
    %v91 = vsel %vm48, %v46, 0.0
    %92 = vadd.xlane.f32.xlu0 %v91
    %v93 = vpop.xlane.xlu0 %92
    %v94 = vsel %vm48, %v47, 0.0
    %95 = vadd.xlane.f32.xlu0 %v94
    %v96 = vpop.xlane.xlu0 %95
    %v97 = vmax.f32 %v51, 1e-24
    %v98 = vmax.f32 %v54, 1e-24
    %v99 = vmax.f32 %v57, 1e-24
    %v100 = vmax.f32 %v60, 1e-24
    %v101 = vmax.f32 %v63, 1e-24
    %v102 = vmax.f32 %v66, 1e-24
    %v103 = vmax.f32 %v69, 1e-24
    %v104 = vmax.f32 %v72, 1e-24
    %v105 = vmax.f32 %v75, 1e-24
    %v106 = vmax.f32 %v78, 1e-24
    %v107 = vmax.f32 %v81, 1e-24
    %v108 = vmax.f32 %v84, 1e-24
    %v109 = vmax.f32 %v87, 1e-24
    %v110 = vmax.f32 %v90, 1e-24
    %v111 = vmax.f32 %v93, 1e-24
    %v112 = vmax.f32 %v96, 1e-24
    %v113 = vrsqrt.pop %v97
    %v114 = vrsqrt.pop %v98
    %v115 = vrsqrt.pop %v99
    %v116 = vrsqrt.pop %v100
    %v117 = vrsqrt.pop %v101
    %v118 = vrsqrt.pop %v102
    %v119 = vrsqrt.pop %v103
    %v120 = vrsqrt.pop %v104
    %v121 = vrsqrt.pop %v105
    %v122 = vrsqrt.pop %v106
    %v123 = vrsqrt.pop %v107
    %v124 = vrsqrt.pop %v108
    %v125 = vrsqrt.pop %v109
    %v126 = vrsqrt.pop %v110
    %v127 = vrsqrt.pop %v111
    %v128 = vrsqrt.pop %v112
    %v129 = vmul.f32 %v16, %v113
    %v130 = vmul.f32 %v17, %v114
    %v131 = vmul.f32 %v18, %v115
    %v132 = vmul.f32 %v19, %v116
    %v133 = vmul.f32 %v20, %v117
    %v134 = vmul.f32 %v21, %v118
    %v135 = vmul.f32 %v22, %v119
    %v136 = vmul.f32 %v23, %v120
    %v137 = vmul.f32 %v24, %v121
    %v138 = vmul.f32 %v25, %v122
    %v139 = vmul.f32 %v26, %v123
    %v140 = vmul.f32 %v27, %v124
    %v141 = vmul.f32 %v28, %v125
    %v142 = vmul.f32 %v29, %v126
    %v143 = vmul.f32 %v30, %v127
    %v144 = vmul.f32 %v31, %v128
    %v145 = vpack.c.bf16 %v130, %v129
    %v146 = vpack.c.bf16 %v132, %v131
    %v147 = vpack.c.bf16 %v134, %v133
    %v148 = vpack.c.bf16 %v136, %v135
    %v149 = vpack.c.bf16 %v138, %v137
    %v150 = vpack.c.bf16 %v140, %v139
    %v151 = vpack.c.bf16 %v142, %v141
    %v152 = vpack.c.bf16 %v144, %v143
    %v153 = vld [vmem:[%s1] sm:$0xf]
    %v154 = vld [vmem:[%s1 + $0x4] sm:$0xf]
    %v155 = vld [vmem:[%s1 + $0x8] sm:$0xf]
    %v156 = vld [vmem:[%s1 + $0xc] sm:$0xf]
    %v161 = vunpack.c.l.b16 %v153
    %v162 = vunpack.c.l.b16 %v154
    %v163 = vunpack.c.l.b16 %v155
    %v164 = vunpack.c.l.b16 %v156
    %v165 = vpack.c.b16 %v162, %v161
    %v166 = vpack.c.b16 %v164, %v163
    %v170 = vsel %vm48, %v145, 0
    %v173 = vsel %vm48, %v146, 0
    %v176 = vsel %vm48, %v147, 0
    %v179 = vsel %vm48, %v148, 0
    %v182 = vsel %vm48, %v149, 0
    %v185 = vsel %vm48, %v150, 0
    %v188 = vsel %vm48, %v151, 0
    %v191 = vsel %vm48, %v152, 0
    %193 = vmatprep.subr.bf16.mxu0 0
    %194 = vmatpush1.bf16.msra.mxu0 %v165
    %195 = vmatprep.subr.bf16.mxu0 0
    %196 = vmatpush1.bf16.msra.mxu0 %v166
    %197 = vmatprep.subr.bf16.mxu0 0
    %198 = vmatpush1.bf16.msra.mxu0 0
    %199 = vmatprep.subr.bf16.mxu0 0
    %200 = vmatpush1.bf16.msra.mxu0 0
    %201 = vmatprep.subr.bf16.mxu0 0
    %202 = vmatpush1.bf16.msra.mxu0 0
    %203 = vmatprep.subr.bf16.mxu0 0
    %204 = vmatpush1.bf16.msra.mxu0 0
    %205 = vmatprep.subr.bf16.mxu0 0
    %206 = vmatpush1.bf16.msra.mxu0 0
    %207 = vmatprep.subr.bf16.mxu0 0
    %208 = vmatpush1.bf16.msra.mxu0 0
    %209 = vmatprep.subr.bf16.mxu0 0
    %210 = vmatpush1.bf16.msra.mxu0 0
    %211 = vmatprep.subr.bf16.mxu0 0
    %212 = vmatpush1.bf16.msra.mxu0 0
    %213 = vmatprep.subr.bf16.mxu0 0
    %214 = vmatpush1.bf16.msra.mxu0 0
    %215 = vmatprep.subr.bf16.mxu0 0
    %216 = vmatpush1.bf16.msra.mxu0 0
    %217 = vmatprep.subr.bf16.mxu0 0
    %218 = vmatpush1.bf16.msra.mxu0 0
    %219 = vmatprep.subr.bf16.mxu0 0
    %220 = vmatpush1.bf16.msra.mxu0 0
    %221 = vmatprep.subr.bf16.mxu0 0
    %222 = vmatpush1.bf16.msra.mxu0 0
    %223 = vmatprep.subr.bf16.mxu0 0
    %224 = vmatpush1.bf16.msra.mxu0 0
    %225 = vmatprep.mubr.bf16.mxu0 0
    %226 = vmatmul.mubr.bf16.gmra.mrb[0].mxu0 %v170
    %v227 = vpop.f32.mrb[0].mxu0
    %v228 = vadd.f32 0.0, %v227
    %v229 = vpop.f32.mrb[0].mxu0
    %v230 = vpop.f32.mrb[0].mxu0
    %v231 = vadd.f32 0.0, %v230
    %v232 = vpop.f32.mrb[0].mxu0
    %233 = vmatprep.mubr.bf16.mxu0 0
    %234 = vmatmul.mubr.bf16.gmra.mrb[0].mxu0 %v173
    %v235 = vpop.f32.mrb[0].mxu0
    %v236 = vadd.f32 0.0, %v235
    %v237 = vpop.f32.mrb[0].mxu0
    %v238 = vpop.f32.mrb[0].mxu0
    %v239 = vadd.f32 0.0, %v238
    %v240 = vpop.f32.mrb[0].mxu0
    %241 = vmatprep.mubr.bf16.mxu0 0
    %242 = vmatmul.mubr.bf16.gmra.mrb[0].mxu0 %v176
    %v243 = vpop.f32.mrb[0].mxu0
    %v244 = vadd.f32 0.0, %v243
    %v245 = vpop.f32.mrb[0].mxu0
    %v246 = vpop.f32.mrb[0].mxu0
    %v247 = vadd.f32 0.0, %v246
    %v248 = vpop.f32.mrb[0].mxu0
    %249 = vmatprep.mubr.bf16.mxu0 0
    %250 = vmatmul.mubr.bf16.gmra.mrb[0].mxu0 %v179
    %v251 = vpop.f32.mrb[0].mxu0
    %v252 = vadd.f32 0.0, %v251
    %v253 = vpop.f32.mrb[0].mxu0
    %v254 = vpop.f32.mrb[0].mxu0
    %v255 = vadd.f32 0.0, %v254
    %v256 = vpop.f32.mrb[0].mxu0
    %257 = vmatprep.mubr.bf16.mxu0 0
    %258 = vmatmul.mubr.bf16.gmra.mrb[0].mxu0 %v182
    %v259 = vpop.f32.mrb[0].mxu0
    %v260 = vadd.f32 0.0, %v259
    %v261 = vpop.f32.mrb[0].mxu0
    %v262 = vpop.f32.mrb[0].mxu0
    %v263 = vadd.f32 0.0, %v262
    %v264 = vpop.f32.mrb[0].mxu0
    %265 = vmatprep.mubr.bf16.mxu0 0
    %266 = vmatmul.mubr.bf16.gmra.mrb[0].mxu0 %v185
    %v267 = vpop.f32.mrb[0].mxu0
    %v268 = vadd.f32 0.0, %v267
    %v269 = vpop.f32.mrb[0].mxu0
    %v270 = vpop.f32.mrb[0].mxu0
    %v271 = vadd.f32 0.0, %v270
    %v272 = vpop.f32.mrb[0].mxu0
    %273 = vmatprep.mubr.bf16.mxu0 0
    %274 = vmatmul.mubr.bf16.gmra.mrb[0].mxu0 %v188
    %v275 = vpop.f32.mrb[0].mxu0
    %v276 = vadd.f32 0.0, %v275
    %v277 = vpop.f32.mrb[0].mxu0
    %v278 = vpop.f32.mrb[0].mxu0
    %v279 = vadd.f32 0.0, %v278
    %v280 = vpop.f32.mrb[0].mxu0
    %281 = vmatprep.mubr.bf16.mxu0 0
    %282 = vmatmul.mubr.bf16.gmra.mrb[0].mxu0 %v191
    %v283 = vpop.f32.mrb[0].mxu0
    %v284 = vadd.f32 0.0, %v283
    %v285 = vpop.f32.mrb[0].mxu0
    %v286 = vpop.f32.mrb[0].mxu0
    %v287 = vadd.f32 0.0, %v286
    %v288 = vpop.f32.mrb[0].mxu0
    %289 = vdwg.mxu0
    %v290 = vpack.c.bf16 %v231, %v228
    %v291 = vpack.c.bf16 %v239, %v236
    %v292 = vpack.c.bf16 %v247, %v244
    %v293 = vpack.c.bf16 %v255, %v252
    %v294 = vpack.c.bf16 %v263, %v260
    %v295 = vpack.c.bf16 %v271, %v268
    %v296 = vpack.c.bf16 %v279, %v276
    %v297 = vpack.c.bf16 %v287, %v284
    %v306 = vunpack.c.l.b16 %v290
    %v307 = vunpack.c.h.b16 %v290
    %v308 = vunpack.c.l.b16 %v291
    %v309 = vunpack.c.h.b16 %v291
    %v310 = vunpack.c.l.b16 %v292
    %v311 = vunpack.c.h.b16 %v292
    %v312 = vunpack.c.l.b16 %v293
    %v313 = vunpack.c.h.b16 %v293
    %v314 = vunpack.c.l.b16 %v294
    %v315 = vunpack.c.h.b16 %v294
    %v316 = vunpack.c.l.b16 %v295
    %v317 = vunpack.c.h.b16 %v295
    %v318 = vunpack.c.l.b16 %v296
    %v319 = vunpack.c.h.b16 %v296
    %v320 = vunpack.c.l.b16 %v297
    %v321 = vunpack.c.h.b16 %v297
    %v322 = vpack.c.b16 %v306, %v306
    %v323 = vpack.c.b16 %v307, %v307
    %v324 = vpack.c.b16 %v308, %v308
    %v325 = vpack.c.b16 %v309, %v309
    %v326 = vpack.c.b16 %v310, %v310
    %v327 = vpack.c.b16 %v311, %v311
    %v328 = vpack.c.b16 %v312, %v312
    %v329 = vpack.c.b16 %v313, %v313
    %v330 = vpack.c.b16 %v314, %v314
    %v331 = vpack.c.b16 %v315, %v315
    %v332 = vpack.c.b16 %v316, %v316
    %v333 = vpack.c.b16 %v317, %v317
    %v334 = vpack.c.b16 %v318, %v318
    %v335 = vpack.c.b16 %v319, %v319
    %v336 = vpack.c.b16 %v320, %v320
    %v337 = vpack.c.b16 %v321, %v321
    %354 = vst [vmem:[#allocation4] sm:$0xf] %v322
    %355 = vst [vmem:[#allocation4 + $0x4] sm:$0xf] %v323
    %356 = vst [vmem:[#allocation4 + $0x8] sm:$0xf] %v324
    %357 = vst [vmem:[#allocation4 + $0xc] sm:$0xf] %v325
    %358 = vst [vmem:[#allocation4 + $0x10] sm:$0xf] %v326
    %359 = vst [vmem:[#allocation4 + $0x14] sm:$0xf] %v327
    %360 = vst [vmem:[#allocation4 + $0x18] sm:$0xf] %v328
    %361 = vst [vmem:[#allocation4 + $0x1c] sm:$0xf] %v329
    %362 = vst [vmem:[#allocation4 + $0x20] sm:$0xf] %v330
    %363 = vst [vmem:[#allocation4 + $0x24] sm:$0xf] %v331
    %364 = vst [vmem:[#allocation4 + $0x28] sm:$0xf] %v332
    %365 = vst [vmem:[#allocation4 + $0x2c] sm:$0xf] %v333
    %366 = vst [vmem:[#allocation4 + $0x30] sm:$0xf] %v334
    %367 = vst [vmem:[#allocation4 + $0x34] sm:$0xf] %v335
    %368 = vst [vmem:[#allocation4 + $0x38] sm:$0xf] %v336
    %369 = vst [vmem:[#allocation4 + $0x3c] sm:$0xf] %v337
    %v370 = vlaneseq
    %v371 = vand.u32 %v370, 127
    %s372 = smul.u32 0, 128
    %v373 = vstv %s372
    %v374 = vadd.s32 %v371, %v373
    %vm375 = vcmp.lt.s32.totalorder %v374, 128
    %v376 = vsel %vm375, %v228, -1e+30
    %v377 = vsel %vm375, %v231, -1e+30
    %v378 = vsel %vm375, %v236, -1e+30
    %v379 = vsel %vm375, %v239, -1e+30
    %v380 = vsel %vm375, %v244, -1e+30
    %v381 = vsel %vm375, %v247, -1e+30
    %v382 = vsel %vm375, %v252, -1e+30
    %v383 = vsel %vm375, %v255, -1e+30
    %v384 = vsel %vm375, %v260, -1e+30
    %v385 = vsel %vm375, %v263, -1e+30
    %v386 = vsel %vm375, %v268, -1e+30
    %v387 = vsel %vm375, %v271, -1e+30
    %v388 = vsel %vm375, %v276, -1e+30
    %v389 = vsel %vm375, %v279, -1e+30
    %v390 = vsel %vm375, %v284, -1e+30
    %v391 = vsel %vm375, %v287, -1e+30
    %392 = vmax.xlane.f32.xlu0 %v376
    %v393 = vpop.xlane.xlu0 %392
    %394 = vmax.xlane.f32.xlu0 %v377
    %v395 = vpop.xlane.xlu0 %394
    %396 = vmax.xlane.f32.xlu0 %v378
    %v397 = vpop.xlane.xlu0 %396
    %398 = vmax.xlane.f32.xlu0 %v379
    %v399 = vpop.xlane.xlu0 %398
    %400 = vmax.xlane.f32.xlu0 %v380
    %v401 = vpop.xlane.xlu0 %400
    %402 = vmax.xlane.f32.xlu0 %v381
    %v403 = vpop.xlane.xlu0 %402
    %404 = vmax.xlane.f32.xlu0 %v382
    %v405 = vpop.xlane.xlu0 %404
    %406 = vmax.xlane.f32.xlu0 %v383
    %v407 = vpop.xlane.xlu0 %406
    %408 = vmax.xlane.f32.xlu0 %v384
    %v409 = vpop.xlane.xlu0 %408
    %410 = vmax.xlane.f32.xlu0 %v385
    %v411 = vpop.xlane.xlu0 %410
    %412 = vmax.xlane.f32.xlu0 %v386
    %v413 = vpop.xlane.xlu0 %412
    %414 = vmax.xlane.f32.xlu0 %v387
    %v415 = vpop.xlane.xlu0 %414
    %416 = vmax.xlane.f32.xlu0 %v388
    %v417 = vpop.xlane.xlu0 %416
    %418 = vmax.xlane.f32.xlu0 %v389
    %v419 = vpop.xlane.xlu0 %418
    %420 = vmax.xlane.f32.xlu0 %v390
    %v421 = vpop.xlane.xlu0 %420
    %422 = vmax.xlane.f32.xlu0 %v391
    %v423 = vpop.xlane.xlu0 %422
    %424 = vmax.index.xlane.f32.xlu0 %v376
    %v425 = vpop.xlane.xlu0 %424
    %426 = vmax.index.xlane.f32.xlu0 %v377
    %v427 = vpop.xlane.xlu0 %426
    %428 = vmax.index.xlane.f32.xlu0 %v378
    %v429 = vpop.xlane.xlu0 %428
    %430 = vmax.index.xlane.f32.xlu0 %v379
    %v431 = vpop.xlane.xlu0 %430
    %432 = vmax.index.xlane.f32.xlu0 %v380
    %v433 = vpop.xlane.xlu0 %432
    %434 = vmax.index.xlane.f32.xlu0 %v381
    %v435 = vpop.xlane.xlu0 %434
    %436 = vmax.index.xlane.f32.xlu0 %v382
    %v437 = vpop.xlane.xlu0 %436
    %438 = vmax.index.xlane.f32.xlu0 %v383
    %v439 = vpop.xlane.xlu0 %438
    %440 = vmax.index.xlane.f32.xlu0 %v384
    %v441 = vpop.xlane.xlu0 %440
    %442 = vmax.index.xlane.f32.xlu0 %v385
    %v443 = vpop.xlane.xlu0 %442
    %444 = vmax.index.xlane.f32.xlu0 %v386
    %v445 = vpop.xlane.xlu0 %444
    %446 = vmax.index.xlane.f32.xlu0 %v387
    %v447 = vpop.xlane.xlu0 %446
    %448 = vmax.index.xlane.f32.xlu0 %v388
    %v449 = vpop.xlane.xlu0 %448
    %450 = vmax.index.xlane.f32.xlu0 %v389
    %v451 = vpop.xlane.xlu0 %450
    %452 = vmax.index.xlane.f32.xlu0 %v390
    %v453 = vpop.xlane.xlu0 %452
    %454 = vmax.index.xlane.f32.xlu0 %v391
    %v455 = vpop.xlane.xlu0 %454
    %v456 = vadd.s32 %v425, %v373
    %v457 = vadd.s32 %v427, %v373
    %v458 = vadd.s32 %v429, %v373
    %v459 = vadd.s32 %v431, %v373
    %v460 = vadd.s32 %v433, %v373
    %v461 = vadd.s32 %v435, %v373
    %v462 = vadd.s32 %v437, %v373
    %v463 = vadd.s32 %v439, %v373
    %v464 = vadd.s32 %v441, %v373
    %v465 = vadd.s32 %v443, %v373
    %v466 = vadd.s32 %v445, %v373
    %v467 = vadd.s32 %v447, %v373
    %v468 = vadd.s32 %v449, %v373
    %v469 = vadd.s32 %v451, %v373
    %v470 = vadd.s32 %v453, %v373
    %v471 = vadd.s32 %v455, %v373
    %p472 = scmp.eq.s32.totalorder 0, 0
    // Predicated region
    $region10: #{tpu_custom_call.1} parent=1 // pred_check
      %p473 = pneg %p472
    $region11: #{tpu_custom_call.1} parent=1 // pred_check_branch
      %475 = sbr.rel (%p473) target = $region13
    $region12: #{tpu_custom_call.1} parent=1 // pred_region
      %v492 = vlaneseq
      %v493 = vshrl.u32 %v492, 7
      %v494 = vsub.s32 %v371, %v493
      %v495 = vrot.slane %v393, %v494
      %v496 = vadd.s32 %v371, 4294967288
      %v497 = vlaneseq
      %v498 = vshrl.u32 %v497, 7
      %v499 = vsub.s32 %v496, %v498
      %v500 = vrot.slane %v395, %v499
      %vm501 = vcmask 130112
      %v502 = vsel %vm501, %v500, %v495
      %v503 = vadd.s32 %v371, 4294967280
      %v504 = vlaneseq
      %v505 = vshrl.u32 %v504, 7
      %v506 = vsub.s32 %v503, %v505
      %v507 = vrot.slane %v397, %v506
      %vm508 = vcmask 195712
      %v509 = vsel %vm508, %v507, %v502
      %v510 = vadd.s32 %v371, 4294967272
      %v511 = vlaneseq
      %v512 = vshrl.u32 %v511, 7
      %v513 = vsub.s32 %v510, %v512
      %v514 = vrot.slane %v399, %v513
      %vm515 = vcmask 261312
      %v516 = vsel %vm515, %v514, %v509
      %v517 = vadd.s32 %v371, 4294967264
      %v518 = vlaneseq
      %v519 = vshrl.u32 %v518, 7
      %v520 = vsub.s32 %v517, %v519
      %v521 = vrot.slane %v401, %v520
      %vm522 = vcmask 326912
      %v523 = vsel %vm522, %v521, %v516
      %v524 = vadd.s32 %v371, 4294967256
      %v525 = vlaneseq
      %v526 = vshrl.u32 %v525, 7
      %v527 = vsub.s32 %v524, %v526
      %v528 = vrot.slane %v403, %v527
      %vm529 = vcmask 392512
      %v530 = vsel %vm529, %v528, %v523
      %v531 = vadd.s32 %v371, 4294967248
      %v532 = vlaneseq
      %v533 = vshrl.u32 %v532, 7
      %v534 = vsub.s32 %v531, %v533
      %v535 = vrot.slane %v405, %v534
      %vm536 = vcmask 458112
      %v537 = vsel %vm536, %v535, %v530
      %v538 = vadd.s32 %v371, 4294967240
      %v539 = vlaneseq
      %v540 = vshrl.u32 %v539, 7
      %v541 = vsub.s32 %v538, %v540
      %v542 = vrot.slane %v407, %v541
      %vm543 = vcmask 523712
      %v544 = vsel %vm543, %v542, %v537
      %v545 = vadd.s32 %v371, 4294967232
      %v546 = vlaneseq
      %v547 = vshrl.u32 %v546, 7
      %v548 = vsub.s32 %v545, %v547
      %v549 = vrot.slane %v409, %v548
      %vm550 = vcmask 589312
      %v551 = vsel %vm550, %v549, %v544
      %v552 = vadd.s32 %v371, 4294967224
      %v553 = vlaneseq
      %v554 = vshrl.u32 %v553, 7
      %v555 = vsub.s32 %v552, %v554
      %v556 = vrot.slane %v411, %v555
      %vm557 = vcmask 654912
      %v558 = vsel %vm557, %v556, %v551
      %v559 = vadd.s32 %v371, 4294967216
      %v560 = vlaneseq
      %v561 = vshrl.u32 %v560, 7
      %v562 = vsub.s32 %v559, %v561
      %v563 = vrot.slane %v413, %v562
      %vm564 = vcmask 720512
      %v565 = vsel %vm564, %v563, %v558
      %v566 = vadd.s32 %v371, 4294967208
      %v567 = vlaneseq
      %v568 = vshrl.u32 %v567, 7
      %v569 = vsub.s32 %v566, %v568
      %v570 = vrot.slane %v415, %v569
      %vm571 = vcmask 786112
      %v572 = vsel %vm571, %v570, %v565
      %v573 = vadd.s32 %v371, 4294967200
      %v574 = vlaneseq
      %v575 = vshrl.u32 %v574, 7
      %v576 = vsub.s32 %v573, %v575
      %v577 = vrot.slane %v417, %v576
      %vm578 = vcmask 851712
      %v579 = vsel %vm578, %v577, %v572
      %v580 = vadd.s32 %v371, 4294967192
      %v581 = vlaneseq
      %v582 = vshrl.u32 %v581, 7
      %v583 = vsub.s32 %v580, %v582
      %v584 = vrot.slane %v419, %v583
      %vm585 = vcmask 917312
      %v586 = vsel %vm585, %v584, %v579
      %v587 = vadd.s32 %v371, 4294967184
      %v588 = vlaneseq
      %v589 = vshrl.u32 %v588, 7
      %v590 = vsub.s32 %v587, %v589
      %v591 = vrot.slane %v421, %v590
      %vm592 = vcmask 982912
      %v593 = vsel %vm592, %v591, %v586
      %v594 = vadd.s32 %v371, 4294967176
      %v595 = vlaneseq
      %v596 = vshrl.u32 %v595, 7
      %v597 = vsub.s32 %v594, %v596
      %v598 = vrot.slane %v423, %v597
      %vm599 = vcmask 1048512
      %v600 = vsel %vm599, %v598, %v593
      %602 = vst [vmem:[#allocation2] sm:$0x1] %v600
      %v603 = vlaneseq
      %v604 = vshrl.u32 %v603, 7
      %v605 = vsub.s32 %v371, %v604
      %v606 = vrot.slane %v456, %v605
      %v607 = vlaneseq
      %v608 = vshrl.u32 %v607, 7
      %v609 = vsub.s32 %v496, %v608
      %v610 = vrot.slane %v457, %v609
      %v611 = vsel %vm501, %v610, %v606
      %v612 = vlaneseq
      %v613 = vshrl.u32 %v612, 7
      %v614 = vsub.s32 %v503, %v613
      %v615 = vrot.slane %v458, %v614
      %v616 = vsel %vm508, %v615, %v611
      %v617 = vlaneseq
      %v618 = vshrl.u32 %v617, 7
      %v619 = vsub.s32 %v510, %v618
      %v620 = vrot.slane %v459, %v619
      %v621 = vsel %vm515, %v620, %v616
      %v622 = vlaneseq
      %v623 = vshrl.u32 %v622, 7
      %v624 = vsub.s32 %v517, %v623
      %v625 = vrot.slane %v460, %v624
      %v626 = vsel %vm522, %v625, %v621
      %v627 = vlaneseq
      %v628 = vshrl.u32 %v627, 7
      %v629 = vsub.s32 %v524, %v628
      %v630 = vrot.slane %v461, %v629
      %v631 = vsel %vm529, %v630, %v626
      %v632 = vlaneseq
      %v633 = vshrl.u32 %v632, 7
      %v634 = vsub.s32 %v531, %v633
      %v635 = vrot.slane %v462, %v634
      %v636 = vsel %vm536, %v635, %v631
      %v637 = vlaneseq
      %v638 = vshrl.u32 %v637, 7
      %v639 = vsub.s32 %v538, %v638
      %v640 = vrot.slane %v463, %v639
      %v641 = vsel %vm543, %v640, %v636
      %v642 = vlaneseq
      %v643 = vshrl.u32 %v642, 7
      %v644 = vsub.s32 %v545, %v643
      %v645 = vrot.slane %v464, %v644
      %v646 = vsel %vm550, %v645, %v641
      %v647 = vlaneseq
      %v648 = vshrl.u32 %v647, 7
      %v649 = vsub.s32 %v552, %v648
      %v650 = vrot.slane %v465, %v649
      %v651 = vsel %vm557, %v650, %v646
      %v652 = vlaneseq
      %v653 = vshrl.u32 %v652, 7
      %v654 = vsub.s32 %v559, %v653
      %v655 = vrot.slane %v466, %v654
      %v656 = vsel %vm564, %v655, %v651
      %v657 = vlaneseq
      %v658 = vshrl.u32 %v657, 7
      %v659 = vsub.s32 %v566, %v658
      %v660 = vrot.slane %v467, %v659
      %v661 = vsel %vm571, %v660, %v656
      %v662 = vlaneseq
      %v663 = vshrl.u32 %v662, 7
      %v664 = vsub.s32 %v573, %v663
      %v665 = vrot.slane %v468, %v664
      %v666 = vsel %vm578, %v665, %v661
      %v667 = vlaneseq
      %v668 = vshrl.u32 %v667, 7
      %v669 = vsub.s32 %v580, %v668
      %v670 = vrot.slane %v469, %v669
      %v671 = vsel %vm585, %v670, %v666
      %v672 = vlaneseq
      %v673 = vshrl.u32 %v672, 7
      %v674 = vsub.s32 %v587, %v673
      %v675 = vrot.slane %v470, %v674
      %v676 = vsel %vm592, %v675, %v671
      %v677 = vlaneseq
      %v678 = vshrl.u32 %v677, 7
      %v679 = vsub.s32 %v594, %v678
      %v680 = vrot.slane %v471, %v679
      %v681 = vsel %vm599, %v680, %v676
      %682 = vst [vmem:[#allocation3] sm:$0x1] %v681
    $region13: #{tpu_custom_call.1} parent=1 // pred_fallthru
      _
    %p683 = scmp.ne.s32.totalorder 0, 0
    // Predicated region
    $region14: #{tpu_custom_call.1} parent=1 // pred_check
      %p684 = pneg %p683
    $region15: #{tpu_custom_call.1} parent=1 // pred_check_branch
      %686 = sbr.rel (%p684) target = $region17
    $region16: #{tpu_custom_call.1} parent=1 // pred_region
      %v687 = vld [vmem:[#allocation2] sm:$0x1]
      %v689 = vlaneseq
      %v690 = vshrl.u32 %v689, 7
      %v691 = vsub.s32 0, %v690
      %v692 = vrot.slane %v687, %v691
      %694 = vbcast.lane.b32.xlu0 %v692, 256
      %v695 = vpop.permute.xlu0 %694
      %s697 = sor.u32 256, 8
      %698 = vbcast.lane.b32.xlu0 %v692, %s697
      %v699 = vpop.permute.xlu0 %698
      %s701 = sor.u32 256, 16
      %702 = vbcast.lane.b32.xlu0 %v692, %s701
      %v703 = vpop.permute.xlu0 %702
      %s705 = sor.u32 256, 24
      %706 = vbcast.lane.b32.xlu0 %v692, %s705
      %v707 = vpop.permute.xlu0 %706
      %s709 = sor.u32 256, 32
      %710 = vbcast.lane.b32.xlu0 %v692, %s709
      %v711 = vpop.permute.xlu0 %710
      %s713 = sor.u32 256, 40
      %714 = vbcast.lane.b32.xlu0 %v692, %s713
      %v715 = vpop.permute.xlu0 %714
      %s717 = sor.u32 256, 48
      %718 = vbcast.lane.b32.xlu0 %v692, %s717
      %v719 = vpop.permute.xlu0 %718
      %s721 = sor.u32 256, 56
      %722 = vbcast.lane.b32.xlu0 %v692, %s721
      %v723 = vpop.permute.xlu0 %722
      %s725 = sor.u32 256, 64
      %726 = vbcast.lane.b32.xlu0 %v692, %s725
      %v727 = vpop.permute.xlu0 %726
      %s729 = sor.u32 256, 72
      %730 = vbcast.lane.b32.xlu0 %v692, %s729
      %v731 = vpop.permute.xlu0 %730
      %s733 = sor.u32 256, 80
      %734 = vbcast.lane.b32.xlu0 %v692, %s733
      %v735 = vpop.permute.xlu0 %734
      %s737 = sor.u32 256, 88
      %738 = vbcast.lane.b32.xlu0 %v692, %s737
      %v739 = vpop.permute.xlu0 %738
      %s741 = sor.u32 256, 96
      %742 = vbcast.lane.b32.xlu0 %v692, %s741
      %v743 = vpop.permute.xlu0 %742
      %s745 = sor.u32 256, 104
      %746 = vbcast.lane.b32.xlu0 %v692, %s745
      %v747 = vpop.permute.xlu0 %746
      %s749 = sor.u32 256, 112
      %750 = vbcast.lane.b32.xlu0 %v692, %s749
      %v751 = vpop.permute.xlu0 %750
      %s753 = sor.u32 256, 120
      %754 = vbcast.lane.b32.xlu0 %v692, %s753
      %v755 = vpop.permute.xlu0 %754
      %vm772 = vcmp.gt.f32.partialorder %v393, %v695
      %vm773 = vcmp.gt.f32.partialorder %v395, %v699
      %vm774 = vcmp.gt.f32.partialorder %v397, %v703
      %vm775 = vcmp.gt.f32.partialorder %v399, %v707
      %vm776 = vcmp.gt.f32.partialorder %v401, %v711
      %vm777 = vcmp.gt.f32.partialorder %v403, %v715
      %vm778 = vcmp.gt.f32.partialorder %v405, %v719
      %vm779 = vcmp.gt.f32.partialorder %v407, %v723
      %vm780 = vcmp.gt.f32.partialorder %v409, %v727
      %vm781 = vcmp.gt.f32.partialorder %v411, %v731
      %vm782 = vcmp.gt.f32.partialorder %v413, %v735
      %vm783 = vcmp.gt.f32.partialorder %v415, %v739
      %vm784 = vcmp.gt.f32.partialorder %v417, %v743
      %vm785 = vcmp.gt.f32.partialorder %v419, %v747
      %vm786 = vcmp.gt.f32.partialorder %v421, %v751
      %vm787 = vcmp.gt.f32.partialorder %v423, %v755
      %v788 = vsel %vm772, %v393, %v695
      %v789 = vsel %vm773, %v395, %v699
      %v790 = vsel %vm774, %v397, %v703
      %v791 = vsel %vm775, %v399, %v707
      %v792 = vsel %vm776, %v401, %v711
      %v793 = vsel %vm777, %v403, %v715
      %v794 = vsel %vm778, %v405, %v719
      %v795 = vsel %vm779, %v407, %v723
      %v796 = vsel %vm780, %v409, %v727
      %v797 = vsel %vm781, %v411, %v731
      %v798 = vsel %vm782, %v413, %v735
      %v799 = vsel %vm783, %v415, %v739
      %v800 = vsel %vm784, %v417, %v743
      %v801 = vsel %vm785, %v419, %v747
      %v802 = vsel %vm786, %v421, %v751
      %v803 = vsel %vm787, %v423, %v755
      %820 = vset.pattern.permute.xlu0 0
      %821 = vperm.xlu0 %820, %v788
      %v822 = vpop.permute.xlu0 %821
      %823 = vset.pattern.permute.xlu0 0
      %824 = vperm.xlu0 %823, %v789
      %v825 = vpop.permute.xlu0 %824
      %826 = vset.pattern.permute.xlu0 0
      %827 = vperm.xlu0 %826, %v790
      %v828 = vpop.permute.xlu0 %827
      %829 = vset.pattern.permute.xlu0 0
      %830 = vperm.xlu0 %829, %v791
      %v831 = vpop.permute.xlu0 %830
      %832 = vset.pattern.permute.xlu0 0
      %833 = vperm.xlu0 %832, %v792
      %v834 = vpop.permute.xlu0 %833
      %835 = vset.pattern.permute.xlu0 0
      %836 = vperm.xlu0 %835, %v793
      %v837 = vpop.permute.xlu0 %836
      %838 = vset.pattern.permute.xlu0 0
      %839 = vperm.xlu0 %838, %v794
      %v840 = vpop.permute.xlu0 %839
      %841 = vset.pattern.permute.xlu0 0
      %842 = vperm.xlu0 %841, %v795
      %v843 = vpop.permute.xlu0 %842
      %844 = vset.pattern.permute.xlu0 0
      %845 = vperm.xlu0 %844, %v796
      %v846 = vpop.permute.xlu0 %845
      %847 = vset.pattern.permute.xlu0 0
      %848 = vperm.xlu0 %847, %v797
      %v849 = vpop.permute.xlu0 %848
      %850 = vset.pattern.permute.xlu0 0
      %851 = vperm.xlu0 %850, %v798
      %v852 = vpop.permute.xlu0 %851
      %853 = vset.pattern.permute.xlu0 0
      %854 = vperm.xlu0 %853, %v799
      %v855 = vpop.permute.xlu0 %854
      %856 = vset.pattern.permute.xlu0 0
      %857 = vperm.xlu0 %856, %v800
      %v858 = vpop.permute.xlu0 %857
      %859 = vset.pattern.permute.xlu0 0
      %860 = vperm.xlu0 %859, %v801
      %v861 = vpop.permute.xlu0 %860
      %862 = vset.pattern.permute.xlu0 0
      %863 = vperm.xlu0 %862, %v802
      %v864 = vpop.permute.xlu0 %863
      %865 = vset.pattern.permute.xlu0 0
      %866 = vperm.xlu0 %865, %v803
      %v867 = vpop.permute.xlu0 %866
      %v868 = vlaneseq
      %v869 = vshrl.u32 %v868, 7
      %v870 = vsub.s32 %v371, %v869
      %v871 = vrot.slane %v822, %v870
      %v872 = vadd.s32 %v371, 4294967288
      %v873 = vlaneseq
      %v874 = vshrl.u32 %v873, 7
      %v875 = vsub.s32 %v872, %v874
      %v876 = vrot.slane %v825, %v875
      %vm877 = vcmask 130112
      %v878 = vsel %vm877, %v876, %v871
      %v879 = vadd.s32 %v371, 4294967280
      %v880 = vlaneseq
      %v881 = vshrl.u32 %v880, 7
      %v882 = vsub.s32 %v879, %v881
      %v883 = vrot.slane %v828, %v882
      %vm884 = vcmask 195712
      %v885 = vsel %vm884, %v883, %v878
      %v886 = vadd.s32 %v371, 4294967272
      %v887 = vlaneseq
      %v888 = vshrl.u32 %v887, 7
      %v889 = vsub.s32 %v886, %v888
      %v890 = vrot.slane %v831, %v889
      %vm891 = vcmask 261312
      %v892 = vsel %vm891, %v890, %v885
      %v893 = vadd.s32 %v371, 4294967264
      %v894 = vlaneseq
      %v895 = vshrl.u32 %v894, 7
      %v896 = vsub.s32 %v893, %v895
      %v897 = vrot.slane %v834, %v896
      %vm898 = vcmask 326912
      %v899 = vsel %vm898, %v897, %v892
      %v900 = vadd.s32 %v371, 4294967256
      %v901 = vlaneseq
      %v902 = vshrl.u32 %v901, 7
      %v903 = vsub.s32 %v900, %v902
      %v904 = vrot.slane %v837, %v903
      %vm905 = vcmask 392512
      %v906 = vsel %vm905, %v904, %v899
      %v907 = vadd.s32 %v371, 4294967248
      %v908 = vlaneseq
      %v909 = vshrl.u32 %v908, 7
      %v910 = vsub.s32 %v907, %v909
      %v911 = vrot.slane %v840, %v910
      %vm912 = vcmask 458112
      %v913 = vsel %vm912, %v911, %v906
      %v914 = vadd.s32 %v371, 4294967240
      %v915 = vlaneseq
      %v916 = vshrl.u32 %v915, 7
      %v917 = vsub.s32 %v914, %v916
      %v918 = vrot.slane %v843, %v917
      %vm919 = vcmask 523712
      %v920 = vsel %vm919, %v918, %v913
      %v921 = vadd.s32 %v371, 4294967232
      %v922 = vlaneseq
      %v923 = vshrl.u32 %v922, 7
      %v924 = vsub.s32 %v921, %v923
      %v925 = vrot.slane %v846, %v924
      %vm926 = vcmask 589312
      %v927 = vsel %vm926, %v925, %v920
      %v928 = vadd.s32 %v371, 4294967224
      %v929 = vlaneseq
      %v930 = vshrl.u32 %v929, 7
      %v931 = vsub.s32 %v928, %v930
      %v932 = vrot.slane %v849, %v931
      %vm933 = vcmask 654912
      %v934 = vsel %vm933, %v932, %v927
      %v935 = vadd.s32 %v371, 4294967216
      %v936 = vlaneseq
      %v937 = vshrl.u32 %v936, 7
      %v938 = vsub.s32 %v935, %v937
      %v939 = vrot.slane %v852, %v938
      %vm940 = vcmask 720512
      %v941 = vsel %vm940, %v939, %v934
      %v942 = vadd.s32 %v371, 4294967208
      %v943 = vlaneseq
      %v944 = vshrl.u32 %v943, 7
      %v945 = vsub.s32 %v942, %v944
      %v946 = vrot.slane %v855, %v945
      %vm947 = vcmask 786112
      %v948 = vsel %vm947, %v946, %v941
      %v949 = vadd.s32 %v371, 4294967200
      %v950 = vlaneseq
      %v951 = vshrl.u32 %v950, 7
      %v952 = vsub.s32 %v949, %v951
      %v953 = vrot.slane %v858, %v952
      %vm954 = vcmask 851712
      %v955 = vsel %vm954, %v953, %v948
      %v956 = vadd.s32 %v371, 4294967192
      %v957 = vlaneseq
      %v958 = vshrl.u32 %v957, 7
      %v959 = vsub.s32 %v956, %v958
      %v960 = vrot.slane %v861, %v959
      %vm961 = vcmask 917312
      %v962 = vsel %vm961, %v960, %v955
      %v963 = vadd.s32 %v371, 4294967184
      %v964 = vlaneseq
      %v965 = vshrl.u32 %v964, 7
      %v966 = vsub.s32 %v963, %v965
      %v967 = vrot.slane %v864, %v966
      %vm968 = vcmask 982912
      %v969 = vsel %vm968, %v967, %v962
      %v970 = vadd.s32 %v371, 4294967176
      %v971 = vlaneseq
      %v972 = vshrl.u32 %v971, 7
      %v973 = vsub.s32 %v970, %v972
      %v974 = vrot.slane %v867, %v973
      %vm975 = vcmask 1048512
      %v976 = vsel %vm975, %v974, %v969
      %978 = vst [vmem:[#allocation2] sm:$0x1] %v976
      %v979 = vld [vmem:[#allocation3] sm:$0x1]
      %v980 = vlaneseq
      %v981 = vshrl.u32 %v980, 7
      %v982 = vsub.s32 0, %v981
      %v983 = vrot.slane %v979, %v982
      %985 = vbcast.lane.b32.xlu0 %v983, 256
      %v986 = vpop.permute.xlu0 %985
      %s988 = sor.u32 256, 8
      %989 = vbcast.lane.b32.xlu0 %v983, %s988
      %v990 = vpop.permute.xlu0 %989
      %s992 = sor.u32 256, 16
      %993 = vbcast.lane.b32.xlu0 %v983, %s992
      %v994 = vpop.permute.xlu0 %993
      %s996 = sor.u32 256, 24
      %997 = vbcast.lane.b32.xlu0 %v983, %s996
      %v998 = vpop.permute.xlu0 %997
      %s1000 = sor.u32 256, 32
      %1001 = vbcast.lane.b32.xlu0 %v983, %s1000
      %v1002 = vpop.permute.xlu0 %1001
      %s1004 = sor.u32 256, 40
      %1005 = vbcast.lane.b32.xlu0 %v983, %s1004
      %v1006 = vpop.permute.xlu0 %1005
      %s1008 = sor.u32 256, 48
      %1009 = vbcast.lane.b32.xlu0 %v983, %s1008
      %v1010 = vpop.permute.xlu0 %1009
      %s1012 = sor.u32 256, 56
      %1013 = vbcast.lane.b32.xlu0 %v983, %s1012
      %v1014 = vpop.permute.xlu0 %1013
      %s1016 = sor.u32 256, 64
      %1017 = vbcast.lane.b32.xlu0 %v983, %s1016
      %v1018 = vpop.permute.xlu0 %1017
      %s1020 = sor.u32 256, 72
      %1021 = vbcast.lane.b32.xlu0 %v983, %s1020
      %v1022 = vpop.permute.xlu0 %1021
      %s1024 = sor.u32 256, 80
      %1025 = vbcast.lane.b32.xlu0 %v983, %s1024
      %v1026 = vpop.permute.xlu0 %1025
      %s1028 = sor.u32 256, 88
      %1029 = vbcast.lane.b32.xlu0 %v983, %s1028
      %v1030 = vpop.permute.xlu0 %1029
      %s1032 = sor.u32 256, 96
      %1033 = vbcast.lane.b32.xlu0 %v983, %s1032
      %v1034 = vpop.permute.xlu0 %1033
      %s1036 = sor.u32 256, 104
      %1037 = vbcast.lane.b32.xlu0 %v983, %s1036
      %v1038 = vpop.permute.xlu0 %1037
      %s1040 = sor.u32 256, 112
      %1041 = vbcast.lane.b32.xlu0 %v983, %s1040
      %v1042 = vpop.permute.xlu0 %1041
      %s1044 = sor.u32 256, 120
      %1045 = vbcast.lane.b32.xlu0 %v983, %s1044
      %v1046 = vpop.permute.xlu0 %1045
      %v1047 = vsel %vm772, %v456, %v986
      %v1048 = vsel %vm773, %v457, %v990
      %v1049 = vsel %vm774, %v458, %v994
      %v1050 = vsel %vm775, %v459, %v998
      %v1051 = vsel %vm776, %v460, %v1002
      %v1052 = vsel %vm777, %v461, %v1006
      %v1053 = vsel %vm778, %v462, %v1010
      %v1054 = vsel %vm779, %v463, %v1014
      %v1055 = vsel %vm780, %v464, %v1018
      %v1056 = vsel %vm781, %v465, %v1022
      %v1057 = vsel %vm782, %v466, %v1026
      %v1058 = vsel %vm783, %v467, %v1030
      %v1059 = vsel %vm784, %v468, %v1034
      %v1060 = vsel %vm785, %v469, %v1038
      %v1061 = vsel %vm786, %v470, %v1042
      %v1062 = vsel %vm787, %v471, %v1046
      %1063 = vset.pattern.permute.xlu0 0
      %1064 = vperm.xlu0 %1063, %v1047
      %v1065 = vpop.permute.xlu0 %1064
      %1066 = vset.pattern.permute.xlu0 0
      %1067 = vperm.xlu0 %1066, %v1048
      %v1068 = vpop.permute.xlu0 %1067
      %1069 = vset.pattern.permute.xlu0 0
      %1070 = vperm.xlu0 %1069, %v1049
      %v1071 = vpop.permute.xlu0 %1070
      %1072 = vset.pattern.permute.xlu0 0
      %1073 = vperm.xlu0 %1072, %v1050
      %v1074 = vpop.permute.xlu0 %1073
      %1075 = vset.pattern.permute.xlu0 0
      %1076 = vperm.xlu0 %1075, %v1051
      %v1077 = vpop.permute.xlu0 %1076
      %1078 = vset.pattern.permute.xlu0 0
      %1079 = vperm.xlu0 %1078, %v1052
      %v1080 = vpop.permute.xlu0 %1079
      %1081 = vset.pattern.permute.xlu0 0
      %1082 = vperm.xlu0 %1081, %v1053
      %v1083 = vpop.permute.xlu0 %1082
      %1084 = vset.pattern.permute.xlu0 0
      %1085 = vperm.xlu0 %1084, %v1054
      %v1086 = vpop.permute.xlu0 %1085
      %1087 = vset.pattern.permute.xlu0 0
      %1088 = vperm.xlu0 %1087, %v1055
      %v1089 = vpop.permute.xlu0 %1088
      %1090 = vset.pattern.permute.xlu0 0
      %1091 = vperm.xlu0 %1090, %v1056
      %v1092 = vpop.permute.xlu0 %1091
      %1093 = vset.pattern.permute.xlu0 0
      %1094 = vperm.xlu0 %1093, %v1057
      %v1095 = vpop.permute.xlu0 %1094
      %1096 = vset.pattern.permute.xlu0 0
      %1097 = vperm.xlu0 %1096, %v1058
      %v1098 = vpop.permute.xlu0 %1097
      %1099 = vset.pattern.permute.xlu0 0
      %1100 = vperm.xlu0 %1099, %v1059
      %v1101 = vpop.permute.xlu0 %1100
      %1102 = vset.pattern.permute.xlu0 0
      %1103 = vperm.xlu0 %1102, %v1060
      %v1104 = vpop.permute.xlu0 %1103
      %1105 = vset.pattern.permute.xlu0 0
      %1106 = vperm.xlu0 %1105, %v1061
      %v1107 = vpop.permute.xlu0 %1106
      %1108 = vset.pattern.permute.xlu0 0
      %1109 = vperm.xlu0 %1108, %v1062
      %v1110 = vpop.permute.xlu0 %1109
      %v1111 = vlaneseq
      %v1112 = vshrl.u32 %v1111, 7
      %v1113 = vsub.s32 %v371, %v1112
      %v1114 = vrot.slane %v1065, %v1113
      %v1115 = vlaneseq
      %v1116 = vshrl.u32 %v1115, 7
      %v1117 = vsub.s32 %v872, %v1116
      %v1118 = vrot.slane %v1068, %v1117
      %v1119 = vsel %vm877, %v1118, %v1114
      %v1120 = vlaneseq
      %v1121 = vshrl.u32 %v1120, 7
      %v1122 = vsub.s32 %v879, %v1121
      %v1123 = vrot.slane %v1071, %v1122
      %v1124 = vsel %vm884, %v1123, %v1119
      %v1125 = vlaneseq
      %v1126 = vshrl.u32 %v1125, 7
      %v1127 = vsub.s32 %v886, %v1126
      %v1128 = vrot.slane %v1074, %v1127
      %v1129 = vsel %vm891, %v1128, %v1124
      %v1130 = vlaneseq
      %v1131 = vshrl.u32 %v1130, 7
      %v1132 = vsub.s32 %v893, %v1131
      %v1133 = vrot.slane %v1077, %v1132
      %v1134 = vsel %vm898, %v1133, %v1129
      %v1135 = vlaneseq
      %v1136 = vshrl.u32 %v1135, 7
      %v1137 = vsub.s32 %v900, %v1136
      %v1138 = vrot.slane %v1080, %v1137
      %v1139 = vsel %vm905, %v1138, %v1134
      %v1140 = vlaneseq
      %v1141 = vshrl.u32 %v1140, 7
      %v1142 = vsub.s32 %v907, %v1141
      %v1143 = vrot.slane %v1083, %v1142
      %v1144 = vsel %vm912, %v1143, %v1139
      %v1145 = vlaneseq
      %v1146 = vshrl.u32 %v1145, 7
      %v1147 = vsub.s32 %v914, %v1146
      %v1148 = vrot.slane %v1086, %v1147
      %v1149 = vsel %vm919, %v1148, %v1144
      %v1150 = vlaneseq
      %v1151 = vshrl.u32 %v1150, 7
      %v1152 = vsub.s32 %v921, %v1151
      %v1153 = vrot.slane %v1089, %v1152
      %v1154 = vsel %vm926, %v1153, %v1149
      %v1155 = vlaneseq
      %v1156 = vshrl.u32 %v1155, 7
      %v1157 = vsub.s32 %v928, %v1156
      %v1158 = vrot.slane %v1092, %v1157
      %v1159 = vsel %vm933, %v1158, %v1154
      %v1160 = vlaneseq
      %v1161 = vshrl.u32 %v1160, 7
      %v1162 = vsub.s32 %v935, %v1161
      %v1163 = vrot.slane %v1095, %v1162
      %v1164 = vsel %vm940, %v1163, %v1159
      %v1165 = vlaneseq
      %v1166 = vshrl.u32 %v1165, 7
      %v1167 = vsub.s32 %v942, %v1166
      %v1168 = vrot.slane %v1098, %v1167
      %v1169 = vsel %vm947, %v1168, %v1164
      %v1170 = vlaneseq
      %v1171 = vshrl.u32 %v1170, 7
      %v1172 = vsub.s32 %v949, %v1171
      %v1173 = vrot.slane %v1101, %v1172
      %v1174 = vsel %vm954, %v1173, %v1169
      %v1175 = vlaneseq
      %v1176 = vshrl.u32 %v1175, 7
      %v1177 = vsub.s32 %v956, %v1176
      %v1178 = vrot.slane %v1104, %v1177
      %v1179 = vsel %vm961, %v1178, %v1174
      %v1180 = vlaneseq
      %v1181 = vshrl.u32 %v1180, 7
      %v1182 = vsub.s32 %v963, %v1181
      %v1183 = vrot.slane %v1107, %v1182
      %v1184 = vsel %vm968, %v1183, %v1179
      %v1185 = vlaneseq
      %v1186 = vshrl.u32 %v1185, 7
      %v1187 = vsub.s32 %v970, %v1186
      %v1188 = vrot.slane %v1110, %v1187
      %v1189 = vsel %vm975, %v1188, %v1184
      %1190 = vst [vmem:[#allocation3] sm:$0x1] %v1189
    $region17: #{tpu_custom_call.1} parent=1 // pred_fallthru
      _
    // Predicated region
    $region18: #{tpu_custom_call.1} parent=1 // pred_check
      %p1191 = pneg %p472
    $region19: #{tpu_custom_call.1} parent=1 // pred_check_branch
      %1193 = sbr.rel (%p1191) target = $region21
    $region20: #{tpu_custom_call.1} parent=1 // pred_region
      %v1194 = vld [vmem:[#allocation3] sm:$0x1]
      %1195 = vst [vmem:[#allocation6] sm:$0x1] %v1194
    $region21: #{tpu_custom_call.1} parent=1 // pred_fallthru
      _
    // Predicated region
    $region22: #{tpu_custom_call.1} parent=1 // pred_check
      _
    $region23: #{tpu_custom_call.1} parent=1 // pred_check_branch
      %1197 = sbr.rel (0) target = $region25
    $region24: #{tpu_custom_call.1} parent=1 // pred_region
      %s1199 = ssub.s32 1024, 1024
      %1200 = vsyncadd [#allocation5], %s1199
      %s1201 = sshll.u32 [#allocation4], 4
      %s1202 = int_to_ptr.vmem [resolvable:$true] %s1201
      %1207 = dma.vmem_to_hbm [thread:$0]  %s1202, 1024, %s2, [#allocation5], 64, 64, 4
    $region25: #{tpu_custom_call.1} parent=1 // pred_fallthru
      _
    // Predicated region
    $region26: #{tpu_custom_call.1} parent=1 // pred_check
      _
    $region27: #{tpu_custom_call.1} parent=1 // pred_check_branch
      %1209 = sbr.rel (0) target = $region29
    $region28: #{tpu_custom_call.1} parent=1 // pred_region
      %s1211 = ssub.s32 16, 16
      %1212 = vsyncadd [#allocation7], %s1211
      %s1214 = sshll.u32 [#allocation6], 4
      %s1215 = int_to_ptr.vmem [resolvable:$true] %s1214
      %1217 = dma.vmem_to_hbm [thread:$0]  %s1215, 16, %s3, [#allocation7]
    $region29: #{tpu_custom_call.1} parent=1 // pred_fallthru
      _
    // Predicated region
    $region30: #{tpu_custom_call.1} parent=1 // pred_check
      _
    $region31: #{tpu_custom_call.1} parent=1 // pred_check_branch
      %1219 = sbr.rel (0) target = $region33
    $region32: #{tpu_custom_call.1} parent=1 // pred_region
      %1220 = dma.done [#allocation5], 1024
    $region33: #{tpu_custom_call.1} parent=1 // pred_fallthru
      _
    // Predicated region
    $region34: #{tpu_custom_call.1} parent=1 // pred_check
      _
    $region35: #{tpu_custom_call.1} parent=1 // pred_check_branch
      %1222 = sbr.rel (0) target = $region37
    $region36: #{tpu_custom_call.1} parent=1 // pred_region
      %1223 = dma.done [#allocation7], 16
    $region37: #{tpu_custom_call.1} parent=1 // pred_fallthru
      _
    %1224 = vsyncpa [#allocation5], 1
    %1225 = vsyncpa [#allocation7], 1

// kernel: tpu_custom_call.1
$region0: #{tpu_custom_call.1}
  #allocation0 [shape = 'u32[]', space=smem, size = 0x4, offset = 0x4, fixed_abs, tag = 'smem constant byte address 0x4 - core index']
  #allocation1 [shape = 'u32[144,128]{1,0:T(1,128)}', space=vmem, size = 0x12000, scoped, tag = 'internal scratch']
  #allocation2 [shape = 'f32[1,128]{1,0:T(1,128)}', space=vmem, size = 0x200, scoped, tag = 'scratch operand']
  #allocation3 [shape = 's32[1,128]{1,0:T(1,128)}', space=vmem, size = 0x200, scoped, tag = 'scratch operand']
  %s0 = inlined_call_operand.vmem [shape: f32[1,128,32], index: 0, kind: input, shape index: {}]
  %s1 = inlined_call_operand.vmem [shape: bf16[1,32,128], index: 1, kind: input, shape index: {}]
  %s2 = inlined_call_operand.hbm [shape: bf16[1,128,128], index: 2, kind: output, shape index: {0}]
  %s3 = inlined_call_operand.hbm [shape: s32[1,128], index: 3, kind: output, shape index: {1}]
  %4 = xla_tuple %s2, %s3
  %s5 = sld [smem:[#allocation0]]
  $region38: #{tpu_custom_call.1} parent=0
    _
  %s7 = ssub.s32 1, %s5
  %s8 = scalar_select 0, %s7, %s5
  $region1: #{tpu_custom_call.1} parent=0
    #allocation4 [shape = 'u8[32768]{0}', space=vmem, size = 0x8000, scoped, tag = 'output window, operand 0, single buffered']
    #allocation5 [shape = 's32[1]{0}', space=sflag, size = 0x4, scoped, tag = 'scoped memory for tpu_custom_call.1']
    #allocation6 [shape = 'u8[512]{0}', space=vmem, size = 0x400, scoped, tag = 'output window, operand 1, single buffered']
    #allocation7 [shape = 's32[1]{0}', space=sflag, size = 0x4, scoped, tag = 'scoped memory for tpu_custom_call.1']
    %9 = vsyncpa [#allocation5], 0
    %10 = vsyncpa [#allocation7], 0
    // Predicated region
    $region2: #{tpu_custom_call.1} parent=1 // pred_check
      _
    $region3: #{tpu_custom_call.1} parent=1 // pred_check_branch
      %12 = sbr.rel (0) target = $region5
    $region4: #{tpu_custom_call.1} parent=1 // pred_region
      _
    $region5: #{tpu_custom_call.1} parent=1 // pred_fallthru
      _
    // Predicated region
    $region6: #{tpu_custom_call.1} parent=1 // pred_check
      _
    $region7: #{tpu_custom_call.1} parent=1 // pred_check_branch
      %14 = sbr.rel (0) target = $region9
    $region8: #{tpu_custom_call.1} parent=1 // pred_region
      _
    $region9: #{tpu_custom_call.1} parent=1 // pred_fallthru
      _
    %v16 = vld [vmem:[%s0] sm:$0xff]
    %v17 = vld [vmem:[%s0 + $0x8] sm:$0xff]
    %v18 = vld [vmem:[%s0 + $0x10] sm:$0xff]
    %v19 = vld [vmem:[%s0 + $0x18] sm:$0xff]
    %v20 = vld [vmem:[%s0 + $0x20] sm:$0xff]
    %v21 = vld [vmem:[%s0 + $0x28] sm:$0xff]
    %v22 = vld [vmem:[%s0 + $0x30] sm:$0xff]
    %v23 = vld [vmem:[%s0 + $0x38] sm:$0xff]
    %v24 = vld [vmem:[%s0 + $0x40] sm:$0xff]
    %v25 = vld [vmem:[%s0 + $0x48] sm:$0xff]
    %v26 = vld [vmem:[%s0 + $0x50] sm:$0xff]
    %v27 = vld [vmem:[%s0 + $0x58] sm:$0xff]
    %v28 = vld [vmem:[%s0 + $0x60] sm:$0xff]
    %v29 = vld [vmem:[%s0 + $0x68] sm:$0xff]
    %v30 = vld [vmem:[%s0 + $0x70] sm:$0xff]
    %v31 = vld [vmem:[%s0 + $0x78] sm:$0xff]
    %v32 = vmul.f32 %v16, %v16
    %v33 = vmul.f32 %v17, %v17
    %v34 = vmul.f32 %v18, %v18
    %v35 = vmul.f32 %v19, %v19
    %v36 = vmul.f32 %v20, %v20
    %v37 = vmul.f32 %v21, %v21
    %v38 = vmul.f32 %v22, %v22
    %v39 = vmul.f32 %v23, %v23
    %v40 = vmul.f32 %v24, %v24
    %v41 = vmul.f32 %v25, %v25
    %v42 = vmul.f32 %v26, %v26
    %v43 = vmul.f32 %v27, %v27
    %v44 = vmul.f32 %v28, %v28
    %v45 = vmul.f32 %v29, %v29
    %v46 = vmul.f32 %v30, %v30
    %v47 = vmul.f32 %v31, %v31
    %vm48 = vcmask 261120
    %v49 = vsel %vm48, %v32, 0.0
    %50 = vadd.xlane.f32.xlu0 %v49
    %v51 = vpop.xlane.xlu0 %50
    %v52 = vsel %vm48, %v33, 0.0
    %53 = vadd.xlane.f32.xlu0 %v52
    %v54 = vpop.xlane.xlu0 %53
    %v55 = vsel %vm48, %v34, 0.0
    %56 = vadd.xlane.f32.xlu0 %v55
    %v57 = vpop.xlane.xlu0 %56
    %v58 = vsel %vm48, %v35, 0.0
    %59 = vadd.xlane.f32.xlu0 %v58
    %v60 = vpop.xlane.xlu0 %59
    %v61 = vsel %vm48, %v36, 0.0
    %62 = vadd.xlane.f32.xlu0 %v61
    %v63 = vpop.xlane.xlu0 %62
    %v64 = vsel %vm48, %v37, 0.0
    %65 = vadd.xlane.f32.xlu0 %v64
    %v66 = vpop.xlane.xlu0 %65
    %v67 = vsel %vm48, %v38, 0.0
    %68 = vadd.xlane.f32.xlu0 %v67
    %v69 = vpop.xlane.xlu0 %68
    %v70 = vsel %vm48, %v39, 0.0
    %71 = vadd.xlane.f32.xlu0 %v70
    %v72 = vpop.xlane.xlu0 %71
    %v73 = vsel %vm48, %v40, 0.0
    %74 = vadd.xlane.f32.xlu0 %v73
    %v75 = vpop.xlane.xlu0 %74
    %v76 = vsel %vm48, %v41, 0.0
    %77 = vadd.xlane.f32.xlu0 %v76
    %v78 = vpop.xlane.xlu0 %77
    %v79 = vsel %vm48, %v42, 0.0
    %80 = vadd.xlane.f32.xlu0 %v79
    %v81 = vpop.xlane.xlu0 %80
    %v82 = vsel %vm48, %v43, 0.0
    %83 = vadd.xlane.f32.xlu0 %v82
    %v84 = vpop.xlane.xlu0 %83
    %v85 = vsel %vm48, %v44, 0.0
    %86 = vadd.xlane.f32.xlu0 %v85
    %v87 = vpop.xlane.xlu0 %86
    %v88 = vsel %vm48, %v45, 0.0
    %89 = vadd.xlane.f32.xlu0 %v88
    %v90 = vpop.xlane.xlu0 %89
    %v91 = vsel %vm48, %v46, 0.0
    %92 = vadd.xlane.f32.xlu0 %v91
    %v93 = vpop.xlane.xlu0 %92
    %v94 = vsel %vm48, %v47, 0.0
    %95 = vadd.xlane.f32.xlu0 %v94
    %v96 = vpop.xlane.xlu0 %95
    %v97 = vmax.f32 %v51, 1e-24
    %v98 = vmax.f32 %v54, 1e-24
    %v99 = vmax.f32 %v57, 1e-24
    %v100 = vmax.f32 %v60, 1e-24
    %v101 = vmax.f32 %v63, 1e-24
    %v102 = vmax.f32 %v66, 1e-24
    %v103 = vmax.f32 %v69, 1e-24
    %v104 = vmax.f32 %v72, 1e-24
    %v105 = vmax.f32 %v75, 1e-24
    %v106 = vmax.f32 %v78, 1e-24
    %v107 = vmax.f32 %v81, 1e-24
    %v108 = vmax.f32 %v84, 1e-24
    %v109 = vmax.f32 %v87, 1e-24
    %v110 = vmax.f32 %v90, 1e-24
    %v111 = vmax.f32 %v93, 1e-24
    %v112 = vmax.f32 %v96, 1e-24
    %v113 = vrsqrt.pop %v97
    %v114 = vrsqrt.pop %v98
    %v115 = vrsqrt.pop %v99
    %v116 = vrsqrt.pop %v100
    %v117 = vrsqrt.pop %v101
    %v118 = vrsqrt.pop %v102
    %v119 = vrsqrt.pop %v103
    %v120 = vrsqrt.pop %v104
    %v121 = vrsqrt.pop %v105
    %v122 = vrsqrt.pop %v106
    %v123 = vrsqrt.pop %v107
    %v124 = vrsqrt.pop %v108
    %v125 = vrsqrt.pop %v109
    %v126 = vrsqrt.pop %v110
    %v127 = vrsqrt.pop %v111
    %v128 = vrsqrt.pop %v112
    %v129 = vmul.f32 %v16, %v113
    %v130 = vmul.f32 %v17, %v114
    %v131 = vmul.f32 %v18, %v115
    %v132 = vmul.f32 %v19, %v116
    %v133 = vmul.f32 %v20, %v117
    %v134 = vmul.f32 %v21, %v118
    %v135 = vmul.f32 %v22, %v119
    %v136 = vmul.f32 %v23, %v120
    %v137 = vmul.f32 %v24, %v121
    %v138 = vmul.f32 %v25, %v122
    %v139 = vmul.f32 %v26, %v123
    %v140 = vmul.f32 %v27, %v124
    %v141 = vmul.f32 %v28, %v125
    %v142 = vmul.f32 %v29, %v126
    %v143 = vmul.f32 %v30, %v127
    %v144 = vmul.f32 %v31, %v128
    %v145 = vpack.c.bf16 %v130, %v129
    %v146 = vpack.c.bf16 %v132, %v131
    %v147 = vpack.c.bf16 %v134, %v133
    %v148 = vpack.c.bf16 %v136, %v135
    %v149 = vpack.c.bf16 %v138, %v137
    %v150 = vpack.c.bf16 %v140, %v139
    %v151 = vpack.c.bf16 %v142, %v141
    %v152 = vpack.c.bf16 %v144, %v143
    %v153 = vld [vmem:[%s1] sm:$0xf]
    %v154 = vld [vmem:[%s1 + $0x4] sm:$0xf]
    %v155 = vld [vmem:[%s1 + $0x8] sm:$0xf]
    %v156 = vld [vmem:[%s1 + $0xc] sm:$0xf]
    %v161 = vunpack.c.l.b16 %v153
    %v162 = vunpack.c.l.b16 %v154
    %v163 = vunpack.c.l.b16 %v155
    %v164 = vunpack.c.l.b16 %v156
    %v165 = vpack.c.b16 %v162, %v161
    %v166 = vpack.c.b16 %v164, %v163
    %v170 = vsel %vm48, %v145, 0
    %v173 = vsel %vm48, %v146, 0
    %v176 = vsel %vm48, %v147, 0
    %v179 = vsel %vm48, %v148, 0
    %v182 = vsel %vm48, %v149, 0
    %v185 = vsel %vm48, %v150, 0
    %v188 = vsel %vm48, %v151, 0
    %v191 = vsel %vm48, %v152, 0
    %193 = vmatprep.subr.bf16.mxu0 0
    %194 = vmatpush1.bf16.msra.mxu0 %v165
    %195 = vmatprep.subr.bf16.mxu0 0
    %196 = vmatpush1.bf16.msra.mxu0 %v166
    %197 = vmatprep.subr.bf16.mxu0 0
    %198 = vmatpush1.bf16.msra.mxu0 0
    %199 = vmatprep.subr.bf16.mxu0 0
    %200 = vmatpush1.bf16.msra.mxu0 0
    %201 = vmatprep.subr.bf16.mxu0 0
    %202 = vmatpush1.bf16.msra.mxu0 0
    %203 = vmatprep.subr.bf16.mxu0 0
    %204 = vmatpush1.bf16.msra.mxu0 0
    %205 = vmatprep.subr.bf16.mxu0 0
    %206 = vmatpush1.bf16.msra.mxu0 0
    %207 = vmatprep.subr.bf16.mxu0 0
    %208 = vmatpush1.bf16.msra.mxu0 0
    %209 = vmatprep.subr.bf16.mxu0 0
    %210 = vmatpush1.bf16.msra.mxu0 0
    %211 = vmatprep.subr.bf16.mxu0 0
    %212 = vmatpush1.bf16.msra.mxu0 0
    %213 = vmatprep.subr.bf16.mxu0 0
    %214 = vmatpush1.bf16.msra.mxu0 0
    %215 = vmatprep.subr.bf16.mxu0 0
    %216 = vmatpush1.bf16.msra.mxu0 0
    %217 = vmatprep.subr.bf16.mxu0 0
    %218 = vmatpush1.bf16.msra.mxu0 0
    %219 = vmatprep.subr.bf16.mxu0 0
    %220 = vmatpush1.bf16.msra.mxu0 0
    %221 = vmatprep.subr.bf16.mxu0 0
    %222 = vmatpush1.bf16.msra.mxu0 0
    %223 = vmatprep.subr.bf16.mxu0 0
    %224 = vmatpush1.bf16.msra.mxu0 0
    %225 = vmatprep.mubr.bf16.mxu0 0
    %226 = vmatmul.mubr.bf16.gmra.mrb[0].mxu0 %v170
    %v227 = vpop.f32.mrb[0].mxu0
    %v228 = vadd.f32 0.0, %v227
    %v229 = vpop.f32.mrb[0].mxu0
    %v230 = vpop.f32.mrb[0].mxu0
    %v231 = vadd.f32 0.0, %v230
    %v232 = vpop.f32.mrb[0].mxu0
    %233 = vmatprep.mubr.bf16.mxu0 0
    %234 = vmatmul.mubr.bf16.gmra.mrb[0].mxu0 %v173
    %v235 = vpop.f32.mrb[0].mxu0
    %v236 = vadd.f32 0.0, %v235
    %v237 = vpop.f32.mrb[0].mxu0
    %v238 = vpop.f32.mrb[0].mxu0
    %v239 = vadd.f32 0.0, %v238
    %v240 = vpop.f32.mrb[0].mxu0
    %241 = vmatprep.mubr.bf16.mxu0 0
    %242 = vmatmul.mubr.bf16.gmra.mrb[0].mxu0 %v176
    %v243 = vpop.f32.mrb[0].mxu0
    %v244 = vadd.f32 0.0, %v243
    %v245 = vpop.f32.mrb[0].mxu0
    %v246 = vpop.f32.mrb[0].mxu0
    %v247 = vadd.f32 0.0, %v246
    %v248 = vpop.f32.mrb[0].mxu0
    %249 = vmatprep.mubr.bf16.mxu0 0
    %250 = vmatmul.mubr.bf16.gmra.mrb[0].mxu0 %v179
    %v251 = vpop.f32.mrb[0].mxu0
    %v252 = vadd.f32 0.0, %v251
    %v253 = vpop.f32.mrb[0].mxu0
    %v254 = vpop.f32.mrb[0].mxu0
    %v255 = vadd.f32 0.0, %v254
    %v256 = vpop.f32.mrb[0].mxu0
    %257 = vmatprep.mubr.bf16.mxu0 0
    %258 = vmatmul.mubr.bf16.gmra.mrb[0].mxu0 %v182
    %v259 = vpop.f32.mrb[0].mxu0
    %v260 = vadd.f32 0.0, %v259
    %v261 = vpop.f32.mrb[0].mxu0
    %v262 = vpop.f32.mrb[0].mxu0
    %v263 = vadd.f32 0.0, %v262
    %v264 = vpop.f32.mrb[0].mxu0
    %265 = vmatprep.mubr.bf16.mxu0 0
    %266 = vmatmul.mubr.bf16.gmra.mrb[0].mxu0 %v185
    %v267 = vpop.f32.mrb[0].mxu0
    %v268 = vadd.f32 0.0, %v267
    %v269 = vpop.f32.mrb[0].mxu0
    %v270 = vpop.f32.mrb[0].mxu0
    %v271 = vadd.f32 0.0, %v270
    %v272 = vpop.f32.mrb[0].mxu0
    %273 = vmatprep.mubr.bf16.mxu0 0
    %274 = vmatmul.mubr.bf16.gmra.mrb[0].mxu0 %v188
    %v275 = vpop.f32.mrb[0].mxu0
    %v276 = vadd.f32 0.0, %v275
    %v277 = vpop.f32.mrb[0].mxu0
    %v278 = vpop.f32.mrb[0].mxu0
    %v279 = vadd.f32 0.0, %v278
    %v280 = vpop.f32.mrb[0].mxu0
    %281 = vmatprep.mubr.bf16.mxu0 0
    %282 = vmatmul.mubr.bf16.gmra.mrb[0].mxu0 %v191
    %v283 = vpop.f32.mrb[0].mxu0
    %v284 = vadd.f32 0.0, %v283
    %v285 = vpop.f32.mrb[0].mxu0
    %v286 = vpop.f32.mrb[0].mxu0
    %v287 = vadd.f32 0.0, %v286
    %v288 = vpop.f32.mrb[0].mxu0
    %289 = vdwg.mxu0
    %v290 = vpack.c.bf16 %v231, %v228
    %v291 = vpack.c.bf16 %v239, %v236
    %v292 = vpack.c.bf16 %v247, %v244
    %v293 = vpack.c.bf16 %v255, %v252
    %v294 = vpack.c.bf16 %v263, %v260
    %v295 = vpack.c.bf16 %v271, %v268
    %v296 = vpack.c.bf16 %v279, %v276
    %v297 = vpack.c.bf16 %v287, %v284
    %v306 = vunpack.c.l.b16 %v290
    %v307 = vunpack.c.h.b16 %v290
    %v308 = vunpack.c.l.b16 %v291
    %v309 = vunpack.c.h.b16 %v291
    %v310 = vunpack.c.l.b16 %v292
    %v311 = vunpack.c.h.b16 %v292
    %v312 = vunpack.c.l.b16 %v293
    %v313 = vunpack.c.h.b16 %v293
    %v314 = vunpack.c.l.b16 %v294
    %v315 = vunpack.c.h.b16 %v294
    %v316 = vunpack.c.l.b16 %v295
    %v317 = vunpack.c.h.b16 %v295
    %v318 = vunpack.c.l.b16 %v296
    %v319 = vunpack.c.h.b16 %v296
    %v320 = vunpack.c.l.b16 %v297
    %v321 = vunpack.c.h.b16 %v297
    %v322 = vpack.c.b16 %v306, %v306
    %v323 = vpack.c.b16 %v307, %v307
    %v324 = vpack.c.b16 %v308, %v308
    %v325 = vpack.c.b16 %v309, %v309
    %v326 = vpack.c.b16 %v310, %v310
    %v327 = vpack.c.b16 %v311, %v311
    %v328 = vpack.c.b16 %v312, %v312
    %v329 = vpack.c.b16 %v313, %v313
    %v330 = vpack.c.b16 %v314, %v314
    %v331 = vpack.c.b16 %v315, %v315
    %v332 = vpack.c.b16 %v316, %v316
    %v333 = vpack.c.b16 %v317, %v317
    %v334 = vpack.c.b16 %v318, %v318
    %v335 = vpack.c.b16 %v319, %v319
    %v336 = vpack.c.b16 %v320, %v320
    %v337 = vpack.c.b16 %v321, %v321
    %354 = vst [vmem:[#allocation4] sm:$0xf] %v322
    %355 = vst [vmem:[#allocation4 + $0x4] sm:$0xf] %v323
    %356 = vst [vmem:[#allocation4 + $0x8] sm:$0xf] %v324
    %357 = vst [vmem:[#allocation4 + $0xc] sm:$0xf] %v325
    %358 = vst [vmem:[#allocation4 + $0x10] sm:$0xf] %v326
    %359 = vst [vmem:[#allocation4 + $0x14] sm:$0xf] %v327
    %360 = vst [vmem:[#allocation4 + $0x18] sm:$0xf] %v328
    %361 = vst [vmem:[#allocation4 + $0x1c] sm:$0xf] %v329
    %362 = vst [vmem:[#allocation4 + $0x20] sm:$0xf] %v330
    %363 = vst [vmem:[#allocation4 + $0x24] sm:$0xf] %v331
    %364 = vst [vmem:[#allocation4 + $0x28] sm:$0xf] %v332
    %365 = vst [vmem:[#allocation4 + $0x2c] sm:$0xf] %v333
    %366 = vst [vmem:[#allocation4 + $0x30] sm:$0xf] %v334
    %367 = vst [vmem:[#allocation4 + $0x34] sm:$0xf] %v335
    %368 = vst [vmem:[#allocation4 + $0x38] sm:$0xf] %v336
    %369 = vst [vmem:[#allocation4 + $0x3c] sm:$0xf] %v337
    %v370 = vlaneseq
    %v371 = vand.u32 %v370, 127
    %s372 = smul.u32 0, 128
    %v373 = vstv %s372
    %v374 = vadd.s32 %v371, %v373
    %vm375 = vcmp.lt.s32.totalorder %v374, 128
    %v376 = vsel %vm375, %v228, -1e+30
    %v377 = vsel %vm375, %v231, -1e+30
    %v378 = vsel %vm375, %v236, -1e+30
    %v379 = vsel %vm375, %v239, -1e+30
    %v380 = vsel %vm375, %v244, -1e+30
    %v381 = vsel %vm375, %v247, -1e+30
    %v382 = vsel %vm375, %v252, -1e+30
    %v383 = vsel %vm375, %v255, -1e+30
    %v384 = vsel %vm375, %v260, -1e+30
    %v385 = vsel %vm375, %v263, -1e+30
    %v386 = vsel %vm375, %v268, -1e+30
    %v387 = vsel %vm375, %v271, -1e+30
    %v388 = vsel %vm375, %v276, -1e+30
    %v389 = vsel %vm375, %v279, -1e+30
    %v390 = vsel %vm375, %v284, -1e+30
    %v391 = vsel %vm375, %v287, -1e+30
    %392 = vmax.xlane.f32.xlu0 %v376
    %v393 = vpop.xlane.xlu0 %392
    %394 = vmax.xlane.f32.xlu0 %v377
    %v395 = vpop.xlane.xlu0 %394
    %396 = vmax.xlane.f32.xlu0 %v378
    %v397 = vpop.xlane.xlu0 %396
    %398 = vmax.xlane.f32.xlu0 %v379
    %v399 = vpop.xlane.xlu0 %398
    %400 = vmax.xlane.f32.xlu0 %v380
    %v401 = vpop.xlane.xlu0 %400
    %402 = vmax.xlane.f32.xlu0 %v381
    %v403 = vpop.xlane.xlu0 %402
    %404 = vmax.xlane.f32.xlu0 %v382
    %v405 = vpop.xlane.xlu0 %404
    %406 = vmax.xlane.f32.xlu0 %v383
    %v407 = vpop.xlane.xlu0 %406
    %408 = vmax.xlane.f32.xlu0 %v384
    %v409 = vpop.xlane.xlu0 %408
    %410 = vmax.xlane.f32.xlu0 %v385
    %v411 = vpop.xlane.xlu0 %410
    %412 = vmax.xlane.f32.xlu0 %v386
    %v413 = vpop.xlane.xlu0 %412
    %414 = vmax.xlane.f32.xlu0 %v387
    %v415 = vpop.xlane.xlu0 %414
    %416 = vmax.xlane.f32.xlu0 %v388
    %v417 = vpop.xlane.xlu0 %416
    %418 = vmax.xlane.f32.xlu0 %v389
    %v419 = vpop.xlane.xlu0 %418
    %420 = vmax.xlane.f32.xlu0 %v390
    %v421 = vpop.xlane.xlu0 %420
    %422 = vmax.xlane.f32.xlu0 %v391
    %v423 = vpop.xlane.xlu0 %422
    %424 = vmax.index.xlane.f32.xlu0 %v376
    %v425 = vpop.xlane.xlu0 %424
    %426 = vmax.index.xlane.f32.xlu0 %v377
    %v427 = vpop.xlane.xlu0 %426
    %428 = vmax.index.xlane.f32.xlu0 %v378
    %v429 = vpop.xlane.xlu0 %428
    %430 = vmax.index.xlane.f32.xlu0 %v379
    %v431 = vpop.xlane.xlu0 %430
    %432 = vmax.index.xlane.f32.xlu0 %v380
    %v433 = vpop.xlane.xlu0 %432
    %434 = vmax.index.xlane.f32.xlu0 %v381
    %v435 = vpop.xlane.xlu0 %434
    %436 = vmax.index.xlane.f32.xlu0 %v382
    %v437 = vpop.xlane.xlu0 %436
    %438 = vmax.index.xlane.f32.xlu0 %v383
    %v439 = vpop.xlane.xlu0 %438
    %440 = vmax.index.xlane.f32.xlu0 %v384
    %v441 = vpop.xlane.xlu0 %440
    %442 = vmax.index.xlane.f32.xlu0 %v385
    %v443 = vpop.xlane.xlu0 %442
    %444 = vmax.index.xlane.f32.xlu0 %v386
    %v445 = vpop.xlane.xlu0 %444
    %446 = vmax.index.xlane.f32.xlu0 %v387
    %v447 = vpop.xlane.xlu0 %446
    %448 = vmax.index.xlane.f32.xlu0 %v388
    %v449 = vpop.xlane.xlu0 %448
    %450 = vmax.index.xlane.f32.xlu0 %v389
    %v451 = vpop.xlane.xlu0 %450
    %452 = vmax.index.xlane.f32.xlu0 %v390
    %v453 = vpop.xlane.xlu0 %452
    %454 = vmax.index.xlane.f32.xlu0 %v391
    %v455 = vpop.xlane.xlu0 %454
    %v456 = vadd.s32 %v425, %v373
    %v457 = vadd.s32 %v427, %v373
    %v458 = vadd.s32 %v429, %v373
    %v459 = vadd.s32 %v431, %v373
    %v460 = vadd.s32 %v433, %v373
    %v461 = vadd.s32 %v435, %v373
    %v462 = vadd.s32 %v437, %v373
    %v463 = vadd.s32 %v439, %v373
    %v464 = vadd.s32 %v441, %v373
    %v465 = vadd.s32 %v443, %v373
    %v466 = vadd.s32 %v445, %v373
    %v467 = vadd.s32 %v447, %v373
    %v468 = vadd.s32 %v449, %v373
    %v469 = vadd.s32 %v451, %v373
    %v470 = vadd.s32 %v453, %v373
    %v471 = vadd.s32 %v455, %v373
    %p472 = scmp.eq.s32.totalorder 0, 0
    // Predicated region
    $region10: #{tpu_custom_call.1} parent=1 // pred_check
      %p473 = pneg %p472
    $region11: #{tpu_custom_call.1} parent=1 // pred_check_branch
      %475 = sbr.rel (%p473) target = $region13
    $region12: #{tpu_custom_call.1} parent=1 // pred_region
      %v492 = vlaneseq
      %v493 = vshrl.u32 %v492, 7
      %v494 = vsub.s32 %v371, %v493
      %v495 = vrot.slane %v393, %v494
      %v496 = vadd.s32 %v371, 4294967288
      %v497 = vlaneseq
      %v498 = vshrl.u32 %v497, 7
      %v499 = vsub.s32 %v496, %v498
      %v500 = vrot.slane %v395, %v499
      %vm501 = vcmask 130112
      %v502 = vsel %vm501, %v500, %v495
      %v503 = vadd.s32 %v371, 4294967280
      %v504 = vlaneseq
      %v505 = vshrl.u32 %v504, 7
      %v506 = vsub.s32 %v503, %v505
      %v507 = vrot.slane %v397, %v506
      %vm508 = vcmask 195712
      %v509 = vsel %vm508, %v507, %v502
      %v510 = vadd.s32 %v371, 4294967272
      %v511 = vlaneseq
      %v512 = vshrl.u32 %v511, 7
      %v513 = vsub.s32 %v510, %v512
      %v514 = vrot.slane %v399, %v513
      %vm515 = vcmask 261312
      %v516 = vsel %vm515, %v514, %v509
      %v517 = vadd.s32 %v371, 4294967264
      %v518 = vlaneseq
      %v519 = vshrl.u32 %v518, 7
      %v520 = vsub.s32 %v517, %v519
      %v521 = vrot.slane %v401, %v520
      %vm522 = vcmask 326912
      %v523 = vsel %vm522, %v521, %v516
      %v524 = vadd.s32 %v371, 4294967256
      %v525 = vlaneseq
      %v526 = vshrl.u32 %v525, 7
      %v527 = vsub.s32 %v524, %v526
      %v528 = vrot.slane %v403, %v527
      %vm529 = vcmask 392512
      %v530 = vsel %vm529, %v528, %v523
      %v531 = vadd.s32 %v371, 4294967248
      %v532 = vlaneseq
      %v533 = vshrl.u32 %v532, 7
      %v534 = vsub.s32 %v531, %v533
      %v535 = vrot.slane %v405, %v534
      %vm536 = vcmask 458112
      %v537 = vsel %vm536, %v535, %v530
      %v538 = vadd.s32 %v371, 4294967240
      %v539 = vlaneseq
      %v540 = vshrl.u32 %v539, 7
      %v541 = vsub.s32 %v538, %v540
      %v542 = vrot.slane %v407, %v541
      %vm543 = vcmask 523712
      %v544 = vsel %vm543, %v542, %v537
      %v545 = vadd.s32 %v371, 4294967232
      %v546 = vlaneseq
      %v547 = vshrl.u32 %v546, 7
      %v548 = vsub.s32 %v545, %v547
      %v549 = vrot.slane %v409, %v548
      %vm550 = vcmask 589312
      %v551 = vsel %vm550, %v549, %v544
      %v552 = vadd.s32 %v371, 4294967224
      %v553 = vlaneseq
      %v554 = vshrl.u32 %v553, 7
      %v555 = vsub.s32 %v552, %v554
      %v556 = vrot.slane %v411, %v555
      %vm557 = vcmask 654912
      %v558 = vsel %vm557, %v556, %v551
      %v559 = vadd.s32 %v371, 4294967216
      %v560 = vlaneseq
      %v561 = vshrl.u32 %v560, 7
      %v562 = vsub.s32 %v559, %v561
      %v563 = vrot.slane %v413, %v562
      %vm564 = vcmask 720512
      %v565 = vsel %vm564, %v563, %v558
      %v566 = vadd.s32 %v371, 4294967208
      %v567 = vlaneseq
      %v568 = vshrl.u32 %v567, 7
      %v569 = vsub.s32 %v566, %v568
      %v570 = vrot.slane %v415, %v569
      %vm571 = vcmask 786112
      %v572 = vsel %vm571, %v570, %v565
      %v573 = vadd.s32 %v371, 4294967200
      %v574 = vlaneseq
      %v575 = vshrl.u32 %v574, 7
      %v576 = vsub.s32 %v573, %v575
      %v577 = vrot.slane %v417, %v576
      %vm578 = vcmask 851712
      %v579 = vsel %vm578, %v577, %v572
      %v580 = vadd.s32 %v371, 4294967192
      %v581 = vlaneseq
      %v582 = vshrl.u32 %v581, 7
      %v583 = vsub.s32 %v580, %v582
      %v584 = vrot.slane %v419, %v583
      %vm585 = vcmask 917312
      %v586 = vsel %vm585, %v584, %v579
      %v587 = vadd.s32 %v371, 4294967184
      %v588 = vlaneseq
      %v589 = vshrl.u32 %v588, 7
      %v590 = vsub.s32 %v587, %v589
      %v591 = vrot.slane %v421, %v590
      %vm592 = vcmask 982912
      %v593 = vsel %vm592, %v591, %v586
      %v594 = vadd.s32 %v371, 4294967176
      %v595 = vlaneseq
      %v596 = vshrl.u32 %v595, 7
      %v597 = vsub.s32 %v594, %v596
      %v598 = vrot.slane %v423, %v597
      %vm599 = vcmask 1048512
      %v600 = vsel %vm599, %v598, %v593
      %602 = vst [vmem:[#allocation2] sm:$0x1] %v600
      %v603 = vlaneseq
      %v604 = vshrl.u32 %v603, 7
      %v605 = vsub.s32 %v371, %v604
      %v606 = vrot.slane %v456, %v605
      %v607 = vlaneseq
      %v608 = vshrl.u32 %v607, 7
      %v609 = vsub.s32 %v496, %v608
      %v610 = vrot.slane %v457, %v609
      %v611 = vsel %vm501, %v610, %v606
      %v612 = vlaneseq
      %v613 = vshrl.u32 %v612, 7
      %v614 = vsub.s32 %v503, %v613
      %v615 = vrot.slane %v458, %v614
      %v616 = vsel %vm508, %v615, %v611
      %v617 = vlaneseq
      %v618 = vshrl.u32 %v617, 7
      %v619 = vsub.s32 %v510, %v618
      %v620 = vrot.slane %v459, %v619
      %v621 = vsel %vm515, %v620, %v616
      %v622 = vlaneseq
      %v623 = vshrl.u32 %v622, 7
      %v624 = vsub.s32 %v517, %v623
      %v625 = vrot.slane %v460, %v624
      %v626 = vsel %vm522, %v625, %v621
      %v627 = vlaneseq
      %v628 = vshrl.u32 %v627, 7
      %v629 = vsub.s32 %v524, %v628
      %v630 = vrot.slane %v461, %v629
      %v631 = vsel %vm529, %v630, %v626
      %v632 = vlaneseq
      %v633 = vshrl.u32 %v632, 7
      %v634 = vsub.s32 %v531, %v633
      %v635 = vrot.slane %v462, %v634
      %v636 = vsel %vm536, %v635, %v631
      %v637 = vlaneseq
      %v638 = vshrl.u32 %v637, 7
      %v639 = vsub.s32 %v538, %v638
      %v640 = vrot.slane %v463, %v639
      %v641 = vsel %vm543, %v640, %v636
      %v642 = vlaneseq
      %v643 = vshrl.u32 %v642, 7
      %v644 = vsub.s32 %v545, %v643
      %v645 = vrot.slane %v464, %v644
      %v646 = vsel %vm550, %v645, %v641
      %v647 = vlaneseq
      %v648 = vshrl.u32 %v647, 7
      %v649 = vsub.s32 %v552, %v648
      %v650 = vrot.slane %v465, %v649
      %v651 = vsel %vm557, %v650, %v646
      %v652 = vlaneseq
      %v653 = vshrl.u32 %v652, 7
      %v654 = vsub.s32 %v559, %v653
      %v655 = vrot.slane %v466, %v654
      %v656 = vsel %vm564, %v655, %v651
      %v657 = vlaneseq
      %v658 = vshrl.u32 %v657, 7
      %v659 = vsub.s32 %v566, %v658
      %v660 = vrot.slane %v467, %v659
      %v661 = vsel %vm571, %v660, %v656
      %v662 = vlaneseq
      %v663 = vshrl.u32 %v662, 7
      %v664 = vsub.s32 %v573, %v663
      %v665 = vrot.slane %v468, %v664
      %v666 = vsel %vm578, %v665, %v661
      %v667 = vlaneseq
      %v668 = vshrl.u32 %v667, 7
      %v669 = vsub.s32 %v580, %v668
      %v670 = vrot.slane %v469, %v669
      %v671 = vsel %vm585, %v670, %v666
      %v672 = vlaneseq
      %v673 = vshrl.u32 %v672, 7
      %v674 = vsub.s32 %v587, %v673
      %v675 = vrot.slane %v470, %v674
      %v676 = vsel %vm592, %v675, %v671
      %v677 = vlaneseq
      %v678 = vshrl.u32 %v677, 7
      %v679 = vsub.s32 %v594, %v678
      %v680 = vrot.slane %v471, %v679
      %v681 = vsel %vm599, %v680, %v676
      %682 = vst [vmem:[#allocation3] sm:$0x1] %v681
    $region13: #{tpu_custom_call.1} parent=1 // pred_fallthru
      _
    %p683 = scmp.ne.s32.totalorder 0, 0
    // Predicated region
    $region14: #{tpu_custom_call.1} parent=1 // pred_check
      %p684 = pneg %p683
    $region15: #{tpu_custom_call.1} parent=1 // pred_check_branch
      %686 = sbr.rel (%p684) target = $region17
    $region16: #{tpu_custom_call.1} parent=1 // pred_region
      %v687 = vld [vmem:[#allocation2] sm:$0x1]
      %v689 = vlaneseq
      %v690 = vshrl.u32 %v689, 7
      %v691 = vsub.s32 0, %v690
      %v692 = vrot.slane %v687, %v691
      %694 = vbcast.lane.b32.xlu0 %v692, 256
      %v695 = vpop.permute.xlu0 %694
      %s697 = sor.u32 256, 8
      %698 = vbcast.lane.b32.xlu0 %v692, %s697
      %v699 = vpop.permute.xlu0 %698
      %s701 = sor.u32 256, 16
      %702 = vbcast.lane.b32.xlu0 %v692, %s701
      %v703 = vpop.permute.xlu0 %702
      %s705 = sor.u32 256, 24
      %706 = vbcast.lane.b32.xlu0 %v692, %s705
      %v707 = vpop.permute.xlu0 %706
      %s709 = sor.u32 256, 32
      %710 = vbcast.lane.b32.xlu0 %v692, %s709
      %v711 = vpop.permute.xlu0 %710
      %s713 = sor.u32 256, 40
      %714 = vbcast.lane.b32.xlu0 %v692, %s713
      %v715 = vpop.permute.xlu0 %714
      %s717 = sor.u32 256, 48
      %718 = vbcast.lane.b32.xlu0 %v692, %s717
      %v719 = vpop.permute.xlu0 %718
      %s721 = sor.u32 256, 56
      %722 = vbcast.lane.b32.xlu0 %v692, %s721
      %v723 = vpop.permute.xlu0 %722
      %s725 = sor.u32 256, 64
      %726 = vbcast.lane.b32.xlu0 %v692, %s725
      %v727 = vpop.permute.xlu0 %726
      %s729 = sor.u32 256, 72
      %730 = vbcast.lane.b32.xlu0 %v692, %s729
      %v731 = vpop.permute.xlu0 %730
      %s733 = sor.u32 256, 80
      %734 = vbcast.lane.b32.xlu0 %v692, %s733
      %v735 = vpop.permute.xlu0 %734
      %s737 = sor.u32 256, 88
      %738 = vbcast.lane.b32.xlu0 %v692, %s737
      %v739 = vpop.permute.xlu0 %738
      %s741 = sor.u32 256, 96
      %742 = vbcast.lane.b32.xlu0 %v692, %s741
      %v743 = vpop.permute.xlu0 %742
      %s745 = sor.u32 256, 104
      %746 = vbcast.lane.b32.xlu0 %v692, %s745
      %v747 = vpop.permute.xlu0 %746
      %s749 = sor.u32 256, 112
      %750 = vbcast.lane.b32.xlu0 %v692, %s749
      %v751 = vpop.permute.xlu0 %750
      %s753 = sor.u32 256, 120
      %754 = vbcast.lane.b32.xlu0 %v692, %s753
      %v755 = vpop.permute.xlu0 %754
      %vm772 = vcmp.gt.f32.partialorder %v393, %v695
      %vm773 = vcmp.gt.f32.partialorder %v395, %v699
      %vm774 = vcmp.gt.f32.partialorder %v397, %v703
      %vm775 = vcmp.gt.f32.partialorder %v399, %v707
      %vm776 = vcmp.gt.f32.partialorder %v401, %v711
      %vm777 = vcmp.gt.f32.partialorder %v403, %v715
      %vm778 = vcmp.gt.f32.partialorder %v405, %v719
      %vm779 = vcmp.gt.f32.partialorder %v407, %v723
      %vm780 = vcmp.gt.f32.partialorder %v409, %v727
      %vm781 = vcmp.gt.f32.partialorder %v411, %v731
      %vm782 = vcmp.gt.f32.partialorder %v413, %v735
      %vm783 = vcmp.gt.f32.partialorder %v415, %v739
      %vm784 = vcmp.gt.f32.partialorder %v417, %v743
      %vm785 = vcmp.gt.f32.partialorder %v419, %v747
      %vm786 = vcmp.gt.f32.partialorder %v421, %v751
      %vm787 = vcmp.gt.f32.partialorder %v423, %v755
      %v788 = vsel %vm772, %v393, %v695
      %v789 = vsel %vm773, %v395, %v699
      %v790 = vsel %vm774, %v397, %v703
      %v791 = vsel %vm775, %v399, %v707
      %v792 = vsel %vm776, %v401, %v711
      %v793 = vsel %vm777, %v403, %v715
      %v794 = vsel %vm778, %v405, %v719
      %v795 = vsel %vm779, %v407, %v723
      %v796 = vsel %vm780, %v409, %v727
      %v797 = vsel %vm781, %v411, %v731
      %v798 = vsel %vm782, %v413, %v735
      %v799 = vsel %vm783, %v415, %v739
      %v800 = vsel %vm784, %v417, %v743
      %v801 = vsel %vm785, %v419, %v747
      %v802 = vsel %vm786, %v421, %v751
      %v803 = vsel %vm787, %v423, %v755
      %820 = vset.pattern.permute.xlu0 0
      %821 = vperm.xlu0 %820, %v788
      %v822 = vpop.permute.xlu0 %821
      %823 = vset.pattern.permute.xlu0 0
      %824 = vperm.xlu0 %823, %v789
      %v825 = vpop.permute.xlu0 %824
      %826 = vset.pattern.permute.xlu0 0
      %827 = vperm.xlu0 %826, %v790
      %v828 = vpop.permute.xlu0 %827
      %829 = vset.pattern.permute.xlu0 0
      %830 = vperm.xlu0 %829, %v791
      %v831 = vpop.permute.xlu0 %830
      %832 = vset.pattern.permute.xlu0 0
      %833 = vperm.xlu0 %832, %v792
      %v834 = vpop.permute.xlu0 %833
      %835 = vset.pattern.permute.xlu0 0
      %836 = vperm.xlu0 %835, %v793
      %v837 = vpop.permute.xlu0 %836
      %838 = vset.pattern.permute.xlu0 0
      %839 = vperm.xlu0 %838, %v794
      %v840 = vpop.permute.xlu0 %839
      %841 = vset.pattern.permute.xlu0 0
      %842 = vperm.xlu0 %841, %v795
      %v843 = vpop.permute.xlu0 %842
      %844 = vset.pattern.permute.xlu0 0
      %845 = vperm.xlu0 %844, %v796
      %v846 = vpop.permute.xlu0 %845
      %847 = vset.pattern.permute.xlu0 0
      %848 = vperm.xlu0 %847, %v797
      %v849 = vpop.permute.xlu0 %848
      %850 = vset.pattern.permute.xlu0 0
      %851 = vperm.xlu0 %850, %v798
      %v852 = vpop.permute.xlu0 %851
      %853 = vset.pattern.permute.xlu0 0
      %854 = vperm.xlu0 %853, %v799
      %v855 = vpop.permute.xlu0 %854
      %856 = vset.pattern.permute.xlu0 0
      %857 = vperm.xlu0 %856, %v800
      %v858 = vpop.permute.xlu0 %857
      %859 = vset.pattern.permute.xlu0 0
      %860 = vperm.xlu0 %859, %v801
      %v861 = vpop.permute.xlu0 %860
      %862 = vset.pattern.permute.xlu0 0
      %863 = vperm.xlu0 %862, %v802
      %v864 = vpop.permute.xlu0 %863
      %865 = vset.pattern.permute.xlu0 0
      %866 = vperm.xlu0 %865, %v803
      %v867 = vpop.permute.xlu0 %866
      %v868 = vlaneseq
      %v869 = vshrl.u32 %v868, 7
      %v870 = vsub.s32 %v371, %v869
      %v871 = vrot.slane %v822, %v870
      %v872 = vadd.s32 %v371, 4294967288
      %v873 = vlaneseq
      %v874 = vshrl.u32 %v873, 7
      %v875 = vsub.s32 %v872, %v874
      %v876 = vrot.slane %v825, %v875
      %vm877 = vcmask 130112
      %v878 = vsel %vm877, %v876, %v871
      %v879 = vadd.s32 %v371, 4294967280
      %v880 = vlaneseq
      %v881 = vshrl.u32 %v880, 7
      %v882 = vsub.s32 %v879, %v881
      %v883 = vrot.slane %v828, %v882
      %vm884 = vcmask 195712
      %v885 = vsel %vm884, %v883, %v878
      %v886 = vadd.s32 %v371, 4294967272
      %v887 = vlaneseq
      %v888 = vshrl.u32 %v887, 7
      %v889 = vsub.s32 %v886, %v888
      %v890 = vrot.slane %v831, %v889
      %vm891 = vcmask 261312
      %v892 = vsel %vm891, %v890, %v885
      %v893 = vadd.s32 %v371, 4294967264
      %v894 = vlaneseq
      %v895 = vshrl.u32 %v894, 7
      %v896 = vsub.s32 %v893, %v895
      %v897 = vrot.slane %v834, %v896
      %vm898 = vcmask 326912
      %v899 = vsel %vm898, %v897, %v892
      %v900 = vadd.s32 %v371, 4294967256
      %v901 = vlaneseq
      %v902 = vshrl.u32 %v901, 7
      %v903 = vsub.s32 %v900, %v902
      %v904 = vrot.slane %v837, %v903
      %vm905 = vcmask 392512
      %v906 = vsel %vm905, %v904, %v899
      %v907 = vadd.s32 %v371, 4294967248
      %v908 = vlaneseq
      %v909 = vshrl.u32 %v908, 7
      %v910 = vsub.s32 %v907, %v909
      %v911 = vrot.slane %v840, %v910
      %vm912 = vcmask 458112
      %v913 = vsel %vm912, %v911, %v906
      %v914 = vadd.s32 %v371, 4294967240
      %v915 = vlaneseq
      %v916 = vshrl.u32 %v915, 7
      %v917 = vsub.s32 %v914, %v916
      %v918 = vrot.slane %v843, %v917
      %vm919 = vcmask 523712
      %v920 = vsel %vm919, %v918, %v913
      %v921 = vadd.s32 %v371, 4294967232
      %v922 = vlaneseq
      %v923 = vshrl.u32 %v922, 7
      %v924 = vsub.s32 %v921, %v923
      %v925 = vrot.slane %v846, %v924
      %vm926 = vcmask 589312
      %v927 = vsel %vm926, %v925, %v920
      %v928 = vadd.s32 %v371, 4294967224
      %v929 = vlaneseq
      %v930 = vshrl.u32 %v929, 7
      %v931 = vsub.s32 %v928, %v930
      %v932 = vrot.slane %v849, %v931
      %vm933 = vcmask 654912
      %v934 = vsel %vm933, %v932, %v927
      %v935 = vadd.s32 %v371, 4294967216
      %v936 = vlaneseq
      %v937 = vshrl.u32 %v936, 7
      %v938 = vsub.s32 %v935, %v937
      %v939 = vrot.slane %v852, %v938
      %vm940 = vcmask 720512
      %v941 = vsel %vm940, %v939, %v934
      %v942 = vadd.s32 %v371, 4294967208
      %v943 = vlaneseq
      %v944 = vshrl.u32 %v943, 7
      %v945 = vsub.s32 %v942, %v944
      %v946 = vrot.slane %v855, %v945
      %vm947 = vcmask 786112
      %v948 = vsel %vm947, %v946, %v941
      %v949 = vadd.s32 %v371, 4294967200
      %v950 = vlaneseq
      %v951 = vshrl.u32 %v950, 7
      %v952 = vsub.s32 %v949, %v951
      %v953 = vrot.slane %v858, %v952
      %vm954 = vcmask 851712
      %v955 = vsel %vm954, %v953, %v948
      %v956 = vadd.s32 %v371, 4294967192
      %v957 = vlaneseq
      %v958 = vshrl.u32 %v957, 7
      %v959 = vsub.s32 %v956, %v958
      %v960 = vrot.slane %v861, %v959
      %vm961 = vcmask 917312
      %v962 = vsel %vm961, %v960, %v955
      %v963 = vadd.s32 %v371, 4294967184
      %v964 = vlaneseq
      %v965 = vshrl.u32 %v964, 7
      %v966 = vsub.s32 %v963, %v965
      %v967 = vrot.slane %v864, %v966
      %vm968 = vcmask 982912
      %v969 = vsel %vm968, %v967, %v962
      %v970 = vadd.s32 %v371, 4294967176
      %v971 = vlaneseq
      %v972 = vshrl.u32 %v971, 7
      %v973 = vsub.s32 %v970, %v972
      %v974 = vrot.slane %v867, %v973
      %vm975 = vcmask 1048512
      %v976 = vsel %vm975, %v974, %v969
      %978 = vst [vmem:[#allocation2] sm:$0x1] %v976
      %v979 = vld [vmem:[#allocation3] sm:$0x1]
      %v980 = vlaneseq
      %v981 = vshrl.u32 %v980, 7
      %v982 = vsub.s32 0, %v981
      %v983 = vrot.slane %v979, %v982
      %985 = vbcast.lane.b32.xlu0 %v983, 256
      %v986 = vpop.permute.xlu0 %985
      %s988 = sor.u32 256, 8
      %989 = vbcast.lane.b32.xlu0 %v983, %s988
      %v990 = vpop.permute.xlu0 %989
      %s992 = sor.u32 256, 16
      %993 = vbcast.lane.b32.xlu0 %v983, %s992
      %v994 = vpop.permute.xlu0 %993
      %s996 = sor.u32 256, 24
      %997 = vbcast.lane.b32.xlu0 %v983, %s996
      %v998 = vpop.permute.xlu0 %997
      %s1000 = sor.u32 256, 32
      %1001 = vbcast.lane.b32.xlu0 %v983, %s1000
      %v1002 = vpop.permute.xlu0 %1001
      %s1004 = sor.u32 256, 40
      %1005 = vbcast.lane.b32.xlu0 %v983, %s1004
      %v1006 = vpop.permute.xlu0 %1005
      %s1008 = sor.u32 256, 48
      %1009 = vbcast.lane.b32.xlu0 %v983, %s1008
      %v1010 = vpop.permute.xlu0 %1009
      %s1012 = sor.u32 256, 56
      %1013 = vbcast.lane.b32.xlu0 %v983, %s1012
      %v1014 = vpop.permute.xlu0 %1013
      %s1016 = sor.u32 256, 64
      %1017 = vbcast.lane.b32.xlu0 %v983, %s1016
      %v1018 = vpop.permute.xlu0 %1017
      %s1020 = sor.u32 256, 72
      %1021 = vbcast.lane.b32.xlu0 %v983, %s1020
      %v1022 = vpop.permute.xlu0 %1021
      %s1024 = sor.u32 256, 80
      %1025 = vbcast.lane.b32.xlu0 %v983, %s1024
      %v1026 = vpop.permute.xlu0 %1025
      %s1028 = sor.u32 256, 88
      %1029 = vbcast.lane.b32.xlu0 %v983, %s1028
      %v1030 = vpop.permute.xlu0 %1029
      %s1032 = sor.u32 256, 96
      %1033 = vbcast.lane.b32.xlu0 %v983, %s1032
      %v1034 = vpop.permute.xlu0 %1033
      %s1036 = sor.u32 256, 104
      %1037 = vbcast.lane.b32.xlu0 %v983, %s1036
      %v1038 = vpop.permute.xlu0 %1037
      %s1040 = sor.u32 256, 112
      %1041 = vbcast.lane.b32.xlu0 %v983, %s1040
      %v1042 = vpop.permute.xlu0 %1041
      %s1044 = sor.u32 256, 120
      %1045 = vbcast.lane.b32.xlu0 %v983, %s1044
      %v1046 = vpop.permute.xlu0 %1045
      %v1047 = vsel %vm772, %v456, %v986
      %v1048 = vsel %vm773, %v457, %v990
      %v1049 = vsel %vm774, %v458, %v994
      %v1050 = vsel %vm775, %v459, %v998
      %v1051 = vsel %vm776, %v460, %v1002
      %v1052 = vsel %vm777, %v461, %v1006
      %v1053 = vsel %vm778, %v462, %v1010
      %v1054 = vsel %vm779, %v463, %v1014
      %v1055 = vsel %vm780, %v464, %v1018
      %v1056 = vsel %vm781, %v465, %v1022
      %v1057 = vsel %vm782, %v466, %v1026
      %v1058 = vsel %vm783, %v467, %v1030
      %v1059 = vsel %vm784, %v468, %v1034
      %v1060 = vsel %vm785, %v469, %v1038
      %v1061 = vsel %vm786, %v470, %v1042
      %v1062 = vsel %vm787, %v471, %v1046
      %1063 = vset.pattern.permute.xlu0 0
      %1064 = vperm.xlu0 %1063, %v1047
      %v1065 = vpop.permute.xlu0 %1064
      %1066 = vset.pattern.permute.xlu0 0
      %1067 = vperm.xlu0 %1066, %v1048
      %v1068 = vpop.permute.xlu0 %1067
      %1069 = vset.pattern.permute.xlu0 0
      %1070 = vperm.xlu0 %1069, %v1049
      %v1071 = vpop.permute.xlu0 %1070
      %1072 = vset.pattern.permute.xlu0 0
      %1073 = vperm.xlu0 %1072, %v1050
      %v1074 = vpop.permute.xlu0 %1073
      %1075 = vset.pattern.permute.xlu0 0
      %1076 = vperm.xlu0 %1075, %v1051
      %v1077 = vpop.permute.xlu0 %1076
      %1078 = vset.pattern.permute.xlu0 0
      %1079 = vperm.xlu0 %1078, %v1052
      %v1080 = vpop.permute.xlu0 %1079
      %1081 = vset.pattern.permute.xlu0 0
      %1082 = vperm.xlu0 %1081, %v1053
      %v1083 = vpop.permute.xlu0 %1082
      %1084 = vset.pattern.permute.xlu0 0
      %1085 = vperm.xlu0 %1084, %v1054
      %v1086 = vpop.permute.xlu0 %1085
      %1087 = vset.pattern.permute.xlu0 0
      %1088 = vperm.xlu0 %1087, %v1055
      %v1089 = vpop.permute.xlu0 %1088
      %1090 = vset.pattern.permute.xlu0 0
      %1091 = vperm.xlu0 %1090, %v1056
      %v1092 = vpop.permute.xlu0 %1091
      %1093 = vset.pattern.permute.xlu0 0
      %1094 = vperm.xlu0 %1093, %v1057
      %v1095 = vpop.permute.xlu0 %1094
      %1096 = vset.pattern.permute.xlu0 0
      %1097 = vperm.xlu0 %1096, %v1058
      %v1098 = vpop.permute.xlu0 %1097
      %1099 = vset.pattern.permute.xlu0 0
      %1100 = vperm.xlu0 %1099, %v1059
      %v1101 = vpop.permute.xlu0 %1100
      %1102 = vset.pattern.permute.xlu0 0
      %1103 = vperm.xlu0 %1102, %v1060
      %v1104 = vpop.permute.xlu0 %1103
      %1105 = vset.pattern.permute.xlu0 0
      %1106 = vperm.xlu0 %1105, %v1061
      %v1107 = vpop.permute.xlu0 %1106
      %1108 = vset.pattern.permute.xlu0 0
      %1109 = vperm.xlu0 %1108, %v1062
      %v1110 = vpop.permute.xlu0 %1109
      %v1111 = vlaneseq
      %v1112 = vshrl.u32 %v1111, 7
      %v1113 = vsub.s32 %v371, %v1112
      %v1114 = vrot.slane %v1065, %v1113
      %v1115 = vlaneseq
      %v1116 = vshrl.u32 %v1115, 7
      %v1117 = vsub.s32 %v872, %v1116
      %v1118 = vrot.slane %v1068, %v1117
      %v1119 = vsel %vm877, %v1118, %v1114
      %v1120 = vlaneseq
      %v1121 = vshrl.u32 %v1120, 7
      %v1122 = vsub.s32 %v879, %v1121
      %v1123 = vrot.slane %v1071, %v1122
      %v1124 = vsel %vm884, %v1123, %v1119
      %v1125 = vlaneseq
      %v1126 = vshrl.u32 %v1125, 7
      %v1127 = vsub.s32 %v886, %v1126
      %v1128 = vrot.slane %v1074, %v1127
      %v1129 = vsel %vm891, %v1128, %v1124
      %v1130 = vlaneseq
      %v1131 = vshrl.u32 %v1130, 7
      %v1132 = vsub.s32 %v893, %v1131
      %v1133 = vrot.slane %v1077, %v1132
      %v1134 = vsel %vm898, %v1133, %v1129
      %v1135 = vlaneseq
      %v1136 = vshrl.u32 %v1135, 7
      %v1137 = vsub.s32 %v900, %v1136
      %v1138 = vrot.slane %v1080, %v1137
      %v1139 = vsel %vm905, %v1138, %v1134
      %v1140 = vlaneseq
      %v1141 = vshrl.u32 %v1140, 7
      %v1142 = vsub.s32 %v907, %v1141
      %v1143 = vrot.slane %v1083, %v1142
      %v1144 = vsel %vm912, %v1143, %v1139
      %v1145 = vlaneseq
      %v1146 = vshrl.u32 %v1145, 7
      %v1147 = vsub.s32 %v914, %v1146
      %v1148 = vrot.slane %v1086, %v1147
      %v1149 = vsel %vm919, %v1148, %v1144
      %v1150 = vlaneseq
      %v1151 = vshrl.u32 %v1150, 7
      %v1152 = vsub.s32 %v921, %v1151
      %v1153 = vrot.slane %v1089, %v1152
      %v1154 = vsel %vm926, %v1153, %v1149
      %v1155 = vlaneseq
      %v1156 = vshrl.u32 %v1155, 7
      %v1157 = vsub.s32 %v928, %v1156
      %v1158 = vrot.slane %v1092, %v1157
      %v1159 = vsel %vm933, %v1158, %v1154
      %v1160 = vlaneseq
      %v1161 = vshrl.u32 %v1160, 7
      %v1162 = vsub.s32 %v935, %v1161
      %v1163 = vrot.slane %v1095, %v1162
      %v1164 = vsel %vm940, %v1163, %v1159
      %v1165 = vlaneseq
      %v1166 = vshrl.u32 %v1165, 7
      %v1167 = vsub.s32 %v942, %v1166
      %v1168 = vrot.slane %v1098, %v1167
      %v1169 = vsel %vm947, %v1168, %v1164
      %v1170 = vlaneseq
      %v1171 = vshrl.u32 %v1170, 7
      %v1172 = vsub.s32 %v949, %v1171
      %v1173 = vrot.slane %v1101, %v1172
      %v1174 = vsel %vm954, %v1173, %v1169
      %v1175 = vlaneseq
      %v1176 = vshrl.u32 %v1175, 7
      %v1177 = vsub.s32 %v956, %v1176
      %v1178 = vrot.slane %v1104, %v1177
      %v1179 = vsel %vm961, %v1178, %v1174
      %v1180 = vlaneseq
      %v1181 = vshrl.u32 %v1180, 7
      %v1182 = vsub.s32 %v963, %v1181
      %v1183 = vrot.slane %v1107, %v1182
      %v1184 = vsel %vm968, %v1183, %v1179
      %v1185 = vlaneseq
      %v1186 = vshrl.u32 %v1185, 7
      %v1187 = vsub.s32 %v970, %v1186
      %v1188 = vrot.slane %v1110, %v1187
      %v1189 = vsel %vm975, %v1188, %v1184
      %1190 = vst [vmem:[#allocation3] sm:$0x1] %v1189
    $region17: #{tpu_custom_call.1} parent=1 // pred_fallthru
      _
    // Predicated region
    $region18: #{tpu_custom_call.1} parent=1 // pred_check
      %p1191 = pneg %p472
    $region19: #{tpu_custom_call.1} parent=1 // pred_check_branch
      %1193 = sbr.rel (%p1191) target = $region21
    $region20: #{tpu_custom_call.1} parent=1 // pred_region
      %v1194 = vld [vmem:[#allocation3] sm:$0x1]
      %1195 = vst [vmem:[#allocation6] sm:$0x1] %v1194
    $region21: #{tpu_custom_call.1} parent=1 // pred_fallthru
      _
    // Predicated region
    $region22: #{tpu_custom_call.1} parent=1 // pred_check
      _
    $region23: #{tpu_custom_call.1} parent=1 // pred_check_branch
      %1197 = sbr.rel (0) target = $region25
    $region24: #{tpu_custom_call.1} parent=1 // pred_region
      %s1199 = ssub.s32 1024, 1024
      %1200 = vsyncadd [#allocation5], %s1199
      %s1201 = sshll.u32 [#allocation4], 4
      %s1202 = int_to_ptr.vmem [resolvable:$true] %s1201
      %1207 = dma.vmem_to_hbm [thread:$0]  %s1202, 1024, %s2, [#allocation5], 64, 64, 4
    $region25: #{tpu_custom_call.1} parent=1 // pred_fallthru
      _
    // Predicated region
    $region26: #{tpu_custom_call.1} parent=1 // pred_check
      _
    $region27: #{tpu_custom_call.1} parent=1 // pred_check_branch
      %1209 = sbr.rel (0) target = $region29
    $region28: #{tpu_custom_call.1} parent=1 // pred_region
      %s1211 = ssub.s32 16, 16
      %1212 = vsyncadd [#allocation7], %s1211
      %s1214 = sshll.u32 [#allocation6], 4
      %s1215 = int_to_ptr.vmem [resolvable:$true] %s1214
      %1217 = dma.vmem_to_hbm [thread:$0]  %s1215, 16, %s3, [#allocation7]
    $region29: #{tpu_custom_call.1} parent=1 // pred_fallthru
      _
    // Predicated region
    $region30: #{tpu_custom_call.1} parent=1 // pred_check
      _
    $region31: #{tpu_custom_call.1} parent=1 // pred_check_branch
      %1219 = sbr.rel (0) target = $region33
    $region32: #{tpu_custom_call.1} parent=1 // pred_region
      %1220 = dma.done [#allocation5], 1024
    $region33: #{tpu_custom_call.1} parent=1 // pred_fallthru
      _
    // Predicated region
    $region34: #{tpu_custom_call.1} parent=1 // pred_check
      _
    $region35: #{tpu_custom_call.1} parent=1 // pred_check_branch
      %1222 = sbr.rel (0) target = $region37
    $region36: #{tpu_custom_call.1} parent=1 // pred_region
      %1223 = dma.done [#allocation7], 16
    $region37: #{tpu_custom_call.1} parent=1 // pred_fallthru
      _
    %1224 = vsyncpa [#allocation5], 1
    %1225 = vsyncpa [#allocation7], 1

</llo_original>
